<compile_context>
chip_gen: v7x
topology: tpu7x:2x2x1
jax: 0.10.0
libtpu: 0.0.40
codegen_flags: <defaults>
</compile_context>

<pallas_src>
import functools

import jax
import jax.numpy as jnp
from jax import lax
from jax.experimental import pallas as pl
from jax.experimental.pallas import tpu as pltpu


# ----------------------------------------------------------------------------
# Kernel
# ----------------------------------------------------------------------------
def _convlstm_kernel(w_ref, p_ref, c_ref, h_out_ref, c_out_ref, *, Chid):
    """One pixel-block per grid step (channel-major layout).

    w_ref     : (4*Chid, Kp)   bf16  im2col weight slab, bias folded at column K
    p_ref     : (Kp, Mblk)     bf16  im2col patches (row K is all-ones)
    c_ref     : (Chid, Mblk)   f32   current cell state
    h_out_ref : (Chid, Mblk)   bf16
    c_out_ref : (Chid, Mblk)   f32
    """
    # Single MXU matmul; bias arrives for free through the padded-K ones row.
    acc = jnp.dot(w_ref[...], p_ref[...], preferred_element_type=jnp.float32)
    conv = jnp.maximum(acc, 0.0)                               # relu (bias already in)

    # Gate slabs are sublane slices at multiples of Chid (tile-aligned).
    # sigmoid(x) = 0.5*tanh(0.5*x)+0.5 -> one EUP push over the whole i|f|o slab.
    ifo = 0.5 * jnp.tanh(0.5 * conv[:3 * Chid, :]) + 0.5
    i_g = ifo[0 * Chid:1 * Chid, :]
    f_g = ifo[1 * Chid:2 * Chid, :]
    o_g = ifo[2 * Chid:3 * Chid, :]
    g_g = jnp.tanh(conv[3 * Chid:4 * Chid, :])

    c_next = f_g * c_ref[...] + i_g * g_g
    h_out_ref[...] = (o_g * jnp.tanh(c_next)).astype(h_out_ref.dtype)
    c_out_ref[...] = c_next


# ----------------------------------------------------------------------------
# One-time parameter packing (hoisted out of the per-step path)
# ----------------------------------------------------------------------------
def pack_convlstm_params(weight_oikk, bias_vec):
    """(Cout, Ctot, KH, KW) weight + (Cout,) bias -> (Cout, Kp) bf16 im2col slab.

    Column ordering is offset-major / channel-minor (matches _build_patches);
    column K holds the bias (multiplied by the all-ones patches row K);
    columns K+1..Kp-1 are zero padding so Kp is a multiple of 128.
    """
    Cout, Ctot, KH, KW = weight_oikk.shape
    K = KH * KW * Ctot
    Kp = ((K + 1 + 127) // 128) * 128
    w = jnp.transpose(weight_oikk, (0, 2, 3, 1)).reshape(Cout, K)
    w = jnp.concatenate(
        [w, bias_vec.reshape(Cout, 1).astype(w.dtype),
         jnp.zeros((Cout, Kp - K - 1), w.dtype)], axis=1)
    return w.astype(jnp.bfloat16)                              # (Cout, Kp)


def _build_patches(comb_cbhw_bf16, KH, KW, Kp):
    """Channel-major im2col: (Ctot, B, H, W) bf16 -> (Kp, B*H*W) bf16 patches.

    Row ordering is offset-major / channel-minor; row K (the first pad row) is
    all-ones so the matmul picks up the bias column of the packed weights.
    """
    Ctot, B, H, W = comb_cbhw_bf16.shape
    ph, pw = KH // 2, KW // 2
    M = B * H * W
    comb_p = jnp.pad(comb_cbhw_bf16, ((0, 0), (0, 0), (ph, ph), (pw, pw)))
    slabs = []
    for dy in range(KH):
        for dx in range(KW):
            slabs.append(comb_p[:, :, dy:dy + H, dx:dx + W].reshape(Ctot, M))
    K = KH * KW * Ctot
    ones_row = jnp.ones((1, M), jnp.bfloat16)                  # bias pickup row
    zero_pad = jnp.zeros((Kp - K - 1, M), jnp.bfloat16)
    return jnp.concatenate(slabs + [ones_row, zero_pad], axis=0)   # (Kp, M)


def _num_pixel_blocks(M):
    """Generation-dependent grid split: 2 only where there are 2 TCs per chip."""
    try:
        kind = jax.devices()[0].device_kind.lower()
    except Exception:  # pragma: no cover - defensive
        kind = ""
    # TODO(synk): on v7x, verify in the trace that "parallel" actually shards the
    # two blocks across both TensorCores; otherwise fall back to 1 here as well.
    if "v7" in kind and M % 256 == 0:
        return 2
    return 1


# ----------------------------------------------------------------------------
# Pallas call + channel-major step
# ----------------------------------------------------------------------------
def _convlstm_pallas(w_packed, patches, c_flat, Chid, nb):
    Cout, Kp = w_packed.shape
    _, M = patches.shape
    mblk = M // nb

    return pl.pallas_call(
        functools.partial(_convlstm_kernel, Chid=Chid),
        out_shape=(
            jax.ShapeDtypeStruct((Chid, M), jnp.bfloat16),     # h_next (bf16 writeback)
            jax.ShapeDtypeStruct((Chid, M), jnp.float32),      # c_next (stays f32)
        ),
        grid_spec=pltpu.PrefetchScalarGridSpec(
            num_scalar_prefetch=0,
            grid=(nb,),
            in_specs=[
                pl.BlockSpec((Cout, Kp), lambda m: (0, 0)),    # weights (resident)
                pl.BlockSpec((Kp, mblk), lambda m: (0, m)),    # im2col patches
                pl.BlockSpec((Chid, mblk), lambda m: (0, m)),  # c_cur
            ],
            out_specs=[
                pl.BlockSpec((Chid, mblk), lambda m: (0, m)),  # h_next (lane-dense)
                pl.BlockSpec((Chid, mblk), lambda m: (0, m)),  # c_next (lane-dense)
            ],
        ),
        compiler_params=pltpu.CompilerParams(
            dimension_semantics=("parallel",)),
    )(w_packed, patches, c_flat)


def convlstm_cell_step_cm(w_packed, x_cm_bf16, h_cm_bf16, c_cm_f32,
                          kernel_size=(3, 3)):
    """Channel-major ConvLSTM step.

    x_cm_bf16 : (Cin,  B, H, W) bf16
    h_cm_bf16 : (Chid, B, H, W) bf16   (recurrent state, kept channel-major/bf16)
    c_cm_f32  : (Chid, B, H, W) f32
    returns (h_next_cm bf16, c_next_cm f32) in the same layout.
    """
    KH, KW = kernel_size
    Chid = h_cm_bf16.shape[0]
    _, B, H, W = x_cm_bf16.shape
    M = B * H * W
    Kp = w_packed.shape[1]

    comb = jnp.concatenate([x_cm_bf16, h_cm_bf16], axis=0)     # (Ctot, B, H, W)
    patches = _build_patches(comb, KH, KW, Kp)                 # (Kp, M)
    nb = _num_pixel_blocks(M)

    h_t, c_t = _convlstm_pallas(w_packed, patches,
                                c_cm_f32.reshape(Chid, M), Chid, nb)
    return h_t.reshape(Chid, B, H, W), c_t.reshape(Chid, B, H, W)


def convlstm_rollout_cm(w_packed, x_seq_cm_bf16, h0_cm_bf16, c0_cm_f32,
                        kernel_size=(3, 3)):
    """T-step rollout with the state kept channel-major between steps."""
    def step(carry, x_t):
        h, c = carry
        h_n, c_n = convlstm_cell_step_cm(w_packed, x_t, h, c, kernel_size)
        return (h_n, c_n), h_n

    (h_T, c_T), h_all = lax.scan(step, (h0_cm_bf16, c0_cm_f32), x_seq_cm_bf16)
    return h_all, h_T, c_T


# ----------------------------------------------------------------------------
# NCHW convenience wrapper (layout conversion only at the sequence boundary)
# ----------------------------------------------------------------------------
def convlstm_cell_forward(x_nchw, h_cur_nchw, c_cur_nchw, h_pre_nchw, w_packed,
                          kernel_size=(3, 3)):
    """Single NCHW step matching the PyTorch forward: returns (h_next, c_next, h_cur)."""
    del h_pre_nchw  # part of the state tuple; the math does not use it
    x_cm = jnp.transpose(x_nchw, (1, 0, 2, 3)).astype(jnp.bfloat16)
    h_cm = jnp.transpose(h_cur_nchw, (1, 0, 2, 3)).astype(jnp.bfloat16)
    c_cm = jnp.transpose(c_cur_nchw, (1, 0, 2, 3)).astype(jnp.float32)

    h_n, c_n = convlstm_cell_step_cm(w_packed, x_cm, h_cm, c_cm, kernel_size)

    h_next = jnp.transpose(h_n.astype(jnp.float32), (1, 0, 2, 3))
    c_next = jnp.transpose(c_n, (1, 0, 2, 3))
    return h_next, c_next, h_cur_nchw


# ----------------------------------------------------------------------------
# Pure-JAX f32 reference of the PyTorch math (for validation)
# ----------------------------------------------------------------------------
def _reference_forward(x, h_cur, c_cur, weight, bias, kernel_size=(3, 3)):
    KH, KW = kernel_size
    combined = jnp.concatenate([x, h_cur], axis=1)
    conv = lax.conv_general_dilated(
        combined, weight, window_strides=(1, 1),
        padding=((KH // 2, KH // 2), (KW // 2, KW // 2)),
        dimension_numbers=("NCHW", "OIHW", "NCHW"))
    conv = jnp.maximum(conv + bias.reshape(1, -1, 1, 1), 0.0)
    cc_i, cc_f, cc_o, cc_g = jnp.split(conv, 4, axis=1)
    i = jax.nn.sigmoid(cc_i); f = jax.nn.sigmoid(cc_f)
    o = jax.nn.sigmoid(cc_o); g = jnp.tanh(cc_g)
    c_next = f * c_cur + i * g
    h_next = o * jnp.tanh(c_next)
    return h_next, c_next, h_cur


if __name__ == "__main__":
    # Small shapes consistent with the module: batch=2, input_dim=4,
    # hidden_dim=32, spatial 16x16, kernel_size=(3,3), seq=8, bias=True.
    B, Cin, Chid, H, W, T = 2, 4, 32, 16, 16, 8
    KH, KW = 3, 3
    Ctot, Cout = Cin + Chid, 4 * Chid

    key = jax.random.PRNGKey(0)
    kx, kh, kc, kw_, kb = jax.random.split(key, 5)

    x_seq = jax.random.normal(kx, (T, B, Cin, H, W), jnp.float32)
    h_cur = jax.random.normal(kh, (B, Chid, H, W), jnp.float32)
    c_cur = jax.random.normal(kc, (B, Chid, H, W), jnp.float32)
    h_pre = jnp.zeros((B, Chid, H, W), jnp.float32)

    # Deterministic synthetic parameters (Conv2d weight: (4*hid, in+hid, KH, KW)).
    fan_in = Ctot * KH * KW
    scale = 1.0 / (fan_in ** 0.5)
    weight = jax.random.uniform(kw_, (Cout, Ctot, KH, KW), jnp.float32,
                                minval=-scale, maxval=scale)
    bias = jax.random.uniform(kb, (Cout,), jnp.float32,
                              minval=-scale, maxval=scale)

    # Prepack once per layer (hoisted out of the per-step path).
    w_packed = pack_convlstm_params(weight, bias)

    # ---- single NCHW step (matches ConvLSTMCell.forward) --------------------
    step_fn = jax.jit(functools.partial(convlstm_cell_forward,
                                        kernel_size=(KH, KW)))
    h_next, c_next, h_out_pre = step_fn(x_seq[0], h_cur, c_cur, h_pre, w_packed)
    jax.block_until_ready((h_next, c_next, h_out_pre))

    h_ref, c_ref, _ = _reference_forward(x_seq[0], h_cur, c_cur, weight, bias,
                                         kernel_size=(KH, KW))
    assert jnp.allclose(h_next, h_ref, atol=2e-2, rtol=2e-2)
    assert jnp.allclose(c_next, c_ref, atol=2e-2, rtol=2e-2)
    assert jnp.array_equal(h_out_pre, h_cur)

    # ---- T-step rollout with persistent channel-major state -----------------
    x_seq_cm = jnp.transpose(x_seq, (0, 2, 1, 3, 4)).astype(jnp.bfloat16)
    h0_cm = jnp.zeros((Chid, B, H, W), jnp.bfloat16)
    c0_cm = jnp.zeros((Chid, B, H, W), jnp.float32)

    rollout_fn = jax.jit(functools.partial(convlstm_rollout_cm,
                                           kernel_size=(KH, KW)))
    h_all, h_T_cm, c_T_cm = rollout_fn(w_packed, x_seq_cm, h0_cm, c0_cm)
    jax.block_until_ready((h_all, h_T_cm, c_T_cm))

    # f32 NCHW reference rollout.
    h_r = jnp.zeros((B, Chid, H, W), jnp.float32)
    c_r = jnp.zeros((B, Chid, H, W), jnp.float32)
    for t in range(T):
        h_r, c_r, _ = _reference_forward(x_seq[t], h_r, c_r, weight, bias,
                                         kernel_size=(KH, KW))
    h_T = jnp.transpose(h_T_cm.astype(jnp.float32), (1, 0, 2, 3))
    c_T = jnp.transpose(c_T_cm, (1, 0, 2, 3))
    assert jnp.allclose(h_T, h_r, atol=5e-2, rtol=5e-2)
    assert jnp.allclose(c_T, c_r, atol=5e-2, rtol=5e-2)

    print("KERNEL_OK")
</pallas_src>

<mosaic_0001>
module attributes {stable_mosaic.version = 11 : i64} {
  func.func @_convlstm_kernel(%arg0: i32, %arg1: memref<128x384xbf16, #tpu.memory_space<vmem>>, %arg2: memref<384x512xbf16, #tpu.memory_space<vmem>>, %arg3: memref<32x512xf32, #tpu.memory_space<vmem>>, %arg4: memref<32x512xbf16, #tpu.memory_space<vmem>>, %arg5: memref<32x512xf32, #tpu.memory_space<vmem>>) attributes {dimension_semantics = [#tpu.dimension_semantics<parallel>], iteration_bounds = array<i64: 1>, scalar_prefetch = 0 : i64, scratch_operands = 0 : i64, tpu.core_type = #tpu.core_type<tc>, window_params = [{pipeline_mode = #tpu.pipeline_mode<synchronous>, transform_indices = @transform_0, window_bounds = array<i64: 128, 384>}, {transform_indices = @transform_1, window_bounds = array<i64: 384, 512>}, {transform_indices = @transform_2, window_bounds = array<i64: 32, 512>}, {transform_indices = @transform_3, window_bounds = array<i64: 32, 512>}, {transform_indices = @transform_4, window_bounds = array<i64: 32, 512>}]} {
    %c0 = arith.constant 0 : index
    %c0_0 = arith.constant 0 : index
    %0 = vector.load %arg1[%c0, %c0_0] : memref<128x384xbf16, #tpu.memory_space<vmem>>, vector<128x384xbf16>
    %c0_1 = arith.constant 0 : index
    %c0_2 = arith.constant 0 : index
    %1 = vector.load %arg2[%c0_1, %c0_2] : memref<384x512xbf16, #tpu.memory_space<vmem>>, vector<384x512xbf16>
    %cst = arith.constant dense<0.000000e+00> : vector<128x512xf32>
    %2 = tpu.matmul %0, %1, %cst {dimension_numbers = #tpu.dot_dimension_numbers<[1], [0], [0], [1], [0, 0, 1, 1], [], []>} : vector<128x384xbf16>, vector<384x512xbf16>, vector<128x512xf32> -> vector<128x512xf32>
    %cst_3 = arith.constant 0.000000e+00 : f32
    %3 = vector.broadcast %cst_3 : f32 to vector<128x512xf32>
    %4 = arith.maximumf %2, %3 : vector<128x512xf32>
    %5 = vector.extract_strided_slice %4 {offsets = [0, 0], sizes = [96, 512], strides = [1, 1]} : vector<128x512xf32> to vector<96x512xf32>
    %cst_4 = arith.constant 5.000000e-01 : f32
    %6 = vector.broadcast %cst_4 : f32 to vector<96x512xf32>
    %7 = arith.mulf %6, %5 : vector<96x512xf32>
    %8 = math.tanh %7 : vector<96x512xf32>
    %cst_5 = arith.constant 5.000000e-01 : f32
    %9 = vector.broadcast %cst_5 : f32 to vector<96x512xf32>
    %10 = arith.mulf %9, %8 : vector<96x512xf32>
    %cst_6 = arith.constant 5.000000e-01 : f32
    %11 = vector.broadcast %cst_6 : f32 to vector<96x512xf32>
    %12 = arith.addf %10, %11 : vector<96x512xf32>
    %13 = vector.extract_strided_slice %12 {offsets = [0, 0], sizes = [32, 512], strides = [1, 1]} : vector<96x512xf32> to vector<32x512xf32>
    %14 = vector.extract_strided_slice %12 {offsets = [32, 0], sizes = [32, 512], strides = [1, 1]} : vector<96x512xf32> to vector<32x512xf32>
    %15 = vector.extract_strided_slice %12 {offsets = [64, 0], sizes = [32, 512], strides = [1, 1]} : vector<96x512xf32> to vector<32x512xf32>
    %16 = vector.extract_strided_slice %4 {offsets = [96, 0], sizes = [32, 512], strides = [1, 1]} : vector<128x512xf32> to vector<32x512xf32>
    %17 = math.tanh %16 : vector<32x512xf32>
    %c0_7 = arith.constant 0 : index
    %c0_8 = arith.constant 0 : index
    %18 = vector.load %arg3[%c0_7, %c0_8] : memref<32x512xf32, #tpu.memory_space<vmem>>, vector<32x512xf32>
    %19 = arith.mulf %14, %18 : vector<32x512xf32>
    %20 = arith.mulf %13, %17 : vector<32x512xf32>
    %21 = arith.addf %19, %20 : vector<32x512xf32>
    %22 = math.tanh %21 : vector<32x512xf32>
    %23 = arith.mulf %15, %22 : vector<32x512xf32>
    %24 = arith.truncf %23 : vector<32x512xf32> to vector<32x512xbf16>
    %c0_9 = arith.constant 0 : index
    %c0_10 = arith.constant 0 : index
    %25 = vector.load %arg4[%c0_9, %c0_10] : memref<32x512xbf16, #tpu.memory_space<vmem>>, vector<32x512xbf16>
    tpu.vector_store %arg4[%c0_9, %c0_10], %24 {strides = array<i32>} : memref<32x512xbf16, #tpu.memory_space<vmem>>, vector<32x512xbf16>,
    %c0_11 = arith.constant 0 : index
    %c0_12 = arith.constant 0 : index
    %26 = vector.load %arg5[%c0_11, %c0_12] : memref<32x512xf32, #tpu.memory_space<vmem>>, vector<32x512xf32>
    tpu.vector_store %arg5[%c0_11, %c0_12], %21 {strides = array<i32>} : memref<32x512xf32, #tpu.memory_space<vmem>>, vector<32x512xf32>,
    return
  }
  func.func @transform_0(%arg0: i32) -> (i32, i32) {
    %c0_i32 = arith.constant 0 : i32
    %c0_i32_0 = arith.constant 0 : i32
    %c0_i32_1 = arith.constant 0 : i32
    return %c0_i32, %c0_i32_0 : i32, i32
  }
  func.func @transform_1(%arg0: i32) -> (i32, i32) {
    %c0_i32 = arith.constant 0 : i32
    %c0_i32_0 = arith.constant 0 : i32
    return %c0_i32, %arg0 : i32, i32
  }
  func.func @transform_2(%arg0: i32) -> (i32, i32) {
    %c0_i32 = arith.constant 0 : i32
    %c0_i32_0 = arith.constant 0 : i32
    return %c0_i32, %arg0 : i32, i32
  }
  func.func @transform_3(%arg0: i32) -> (i32, i32) {
    %c0_i32 = arith.constant 0 : i32
    %c0_i32_0 = arith.constant 0 : i32
    return %c0_i32, %arg0 : i32, i32
  }
  func.func @transform_4(%arg0: i32) -> (i32, i32) {
    %c0_i32 = arith.constant 0 : i32
    %c0_i32_0 = arith.constant 0 : i32
    return %c0_i32, %arg0 : i32, i32
  }
}

</mosaic_0001>

<llo_original>
// kernel: convlstm_cell_forward.1
$region0: #{convlstm_cell_forward.1}
  #allocation0 [shape = 'u32[]', space=smem, size = 0x4, offset = 0x4, fixed_abs, tag = 'smem constant byte address 0x4 - core index']
  #allocation1 [shape = 'u32[144,128]{1,0:T(1,128)}', space=vmem, size = 0x12000, scoped, tag = 'internal scratch']
  %s0 = inlined_call_operand.vmem [shape: bf16[128,384], index: 0, kind: input, shape index: {}]
  %s1 = inlined_call_operand.vmem [shape: bf16[384,512], index: 1, kind: input, shape index: {}]
  %s2 = inlined_call_operand.vmem [shape: f32[32,512], index: 2, kind: input, shape index: {}]
  %s3 = inlined_call_operand.vmem [shape: bf16[32,512], index: 3, kind: output, shape index: {0}]
  %s4 = inlined_call_operand.vmem [shape: f32[32,512], index: 4, kind: output, shape index: {1}]
  %5 = xla_tuple %s3, %s4
  %s6 = sld [smem:[#allocation0]]
  $region30: #{convlstm_cell_forward.1} parent=0
    _
  %s8 = ssub.s32 1, %s6
  %s9 = scalar_select 0, %s8, %s6
  // Predicated region
  $region2: #{convlstm_cell_forward.1} parent=0 // pred_check
    _
  $region3: #{convlstm_cell_forward.1} parent=0 // pred_check_branch
    %11 = sbr.rel (0) target = $region5
  $region4: #{convlstm_cell_forward.1} parent=0 // pred_region
    _
  $region5: #{convlstm_cell_forward.1} parent=0 // pred_fallthru
    _
  // Predicated region
  $region6: #{convlstm_cell_forward.1} parent=0 // pred_check
    _
  $region7: #{convlstm_cell_forward.1} parent=0 // pred_check_branch
    %13 = sbr.rel (0) target = $region9
  $region8: #{convlstm_cell_forward.1} parent=0 // pred_region
    _
  $region9: #{convlstm_cell_forward.1} parent=0 // pred_fallthru
    _
  // Predicated region
  $region10: #{convlstm_cell_forward.1} parent=0 // pred_check
    _
  $region11: #{convlstm_cell_forward.1} parent=0 // pred_check_branch
    %15 = sbr.rel (0) target = $region13
  $region12: #{convlstm_cell_forward.1} parent=0 // pred_region
    _
  $region13: #{convlstm_cell_forward.1} parent=0 // pred_fallthru
    _
  %v17 = vld [vmem:[%s0] sm:$0xff]
  %v18 = vld [vmem:[%s0 + $0x8] sm:$0xf]
  %v19 = vld [vmem:[%s0 + $0xc] sm:$0xff]
  %v20 = vld [vmem:[%s0 + $0x14] sm:$0xf]
  %v21 = vld [vmem:[%s0 + $0x18] sm:$0xff]
  %v22 = vld [vmem:[%s0 + $0x20] sm:$0xf]
  %v23 = vld [vmem:[%s0 + $0x24] sm:$0xff]
  %v24 = vld [vmem:[%s0 + $0x2c] sm:$0xf]
  %v25 = vld [vmem:[%s0 + $0x30] sm:$0xff]
  %v26 = vld [vmem:[%s0 + $0x38] sm:$0xf]
  %v27 = vld [vmem:[%s0 + $0x3c] sm:$0xff]
  %v28 = vld [vmem:[%s0 + $0x44] sm:$0xf]
  %v29 = vld [vmem:[%s0 + $0x48] sm:$0xff]
  %v30 = vld [vmem:[%s0 + $0x50] sm:$0xf]
  %v31 = vld [vmem:[%s0 + $0x54] sm:$0xff]
  %v32 = vld [vmem:[%s0 + $0x5c] sm:$0xf]
  %v33 = vld [vmem:[%s0 + $0x60] sm:$0xff]
  %v34 = vld [vmem:[%s0 + $0x68] sm:$0xf]
  %v35 = vld [vmem:[%s0 + $0x6c] sm:$0xff]
  %v36 = vld [vmem:[%s0 + $0x74] sm:$0xf]
  %v37 = vld [vmem:[%s0 + $0x78] sm:$0xff]
  %v38 = vld [vmem:[%s0 + $0x80] sm:$0xf]
  %v39 = vld [vmem:[%s0 + $0x84] sm:$0xff]
  %v40 = vld [vmem:[%s0 + $0x8c] sm:$0xf]
  %v41 = vld [vmem:[%s0 + $0x90] sm:$0xff]
  %v42 = vld [vmem:[%s0 + $0x98] sm:$0xf]
  %v43 = vld [vmem:[%s0 + $0x9c] sm:$0xff]
  %v44 = vld [vmem:[%s0 + $0xa4] sm:$0xf]
  %v45 = vld [vmem:[%s0 + $0xa8] sm:$0xff]
  %v46 = vld [vmem:[%s0 + $0xb0] sm:$0xf]
  %v47 = vld [vmem:[%s0 + $0xb4] sm:$0xff]
  %v48 = vld [vmem:[%s0 + $0xbc] sm:$0xf]
  %v49 = vld [vmem:[%s1] sm:$0xff]
  %v50 = vld [vmem:[%s1 + $0x8] sm:$0xff]
  %v51 = vld [vmem:[%s1 + $0x10] sm:$0xff]
  %v52 = vld [vmem:[%s1 + $0x18] sm:$0xff]
  %v53 = vld [vmem:[%s1 + $0x20] sm:$0xff]
  %v54 = vld [vmem:[%s1 + $0x28] sm:$0xff]
  %v55 = vld [vmem:[%s1 + $0x30] sm:$0xff]
  %v56 = vld [vmem:[%s1 + $0x38] sm:$0xff]
  %v57 = vld [vmem:[%s1 + $0x40] sm:$0xff]
  %v58 = vld [vmem:[%s1 + $0x48] sm:$0xff]
  %v59 = vld [vmem:[%s1 + $0x50] sm:$0xff]
  %v60 = vld [vmem:[%s1 + $0x58] sm:$0xff]
  %v61 = vld [vmem:[%s1 + $0x60] sm:$0xff]
  %v62 = vld [vmem:[%s1 + $0x68] sm:$0xff]
  %v63 = vld [vmem:[%s1 + $0x70] sm:$0xff]
  %v64 = vld [vmem:[%s1 + $0x78] sm:$0xff]
  %v65 = vld [vmem:[%s1 + $0x80] sm:$0xff]
  %v66 = vld [vmem:[%s1 + $0x88] sm:$0xff]
  %v67 = vld [vmem:[%s1 + $0x90] sm:$0xff]
  %v68 = vld [vmem:[%s1 + $0x98] sm:$0xff]
  %v69 = vld [vmem:[%s1 + $0xa0] sm:$0xff]
  %v70 = vld [vmem:[%s1 + $0xa8] sm:$0xff]
  %v71 = vld [vmem:[%s1 + $0xb0] sm:$0xff]
  %v72 = vld [vmem:[%s1 + $0xb8] sm:$0xff]
  %v73 = vld [vmem:[%s1 + $0xc0] sm:$0xff]
  %v74 = vld [vmem:[%s1 + $0xc8] sm:$0xff]
  %v75 = vld [vmem:[%s1 + $0xd0] sm:$0xff]
  %v76 = vld [vmem:[%s1 + $0xd8] sm:$0xff]
  %v77 = vld [vmem:[%s1 + $0xe0] sm:$0xff]
  %v78 = vld [vmem:[%s1 + $0xe8] sm:$0xff]
  %v79 = vld [vmem:[%s1 + $0xf0] sm:$0xff]
  %v80 = vld [vmem:[%s1 + $0xf8] sm:$0xff]
  %v81 = vld [vmem:[%s1 + $0x100] sm:$0xff]
  %v82 = vld [vmem:[%s1 + $0x108] sm:$0xff]
  %v83 = vld [vmem:[%s1 + $0x110] sm:$0xff]
  %v84 = vld [vmem:[%s1 + $0x118] sm:$0xff]
  %v85 = vld [vmem:[%s1 + $0x120] sm:$0xff]
  %v86 = vld [vmem:[%s1 + $0x128] sm:$0xff]
  %v87 = vld [vmem:[%s1 + $0x130] sm:$0xff]
  %v88 = vld [vmem:[%s1 + $0x138] sm:$0xff]
  %v89 = vld [vmem:[%s1 + $0x140] sm:$0xff]
  %v90 = vld [vmem:[%s1 + $0x148] sm:$0xff]
  %v91 = vld [vmem:[%s1 + $0x150] sm:$0xff]
  %v92 = vld [vmem:[%s1 + $0x158] sm:$0xff]
  %v93 = vld [vmem:[%s1 + $0x160] sm:$0xff]
  %v94 = vld [vmem:[%s1 + $0x168] sm:$0xff]
  %v95 = vld [vmem:[%s1 + $0x170] sm:$0xff]
  %v96 = vld [vmem:[%s1 + $0x178] sm:$0xff]
  %v97 = vld [vmem:[%s1 + $0x180] sm:$0xff]
  %v98 = vld [vmem:[%s1 + $0x188] sm:$0xff]
  %v99 = vld [vmem:[%s1 + $0x190] sm:$0xff]
  %v100 = vld [vmem:[%s1 + $0x198] sm:$0xff]
  %v101 = vld [vmem:[%s1 + $0x1a0] sm:$0xff]
  %v102 = vld [vmem:[%s1 + $0x1a8] sm:$0xff]
  %v103 = vld [vmem:[%s1 + $0x1b0] sm:$0xff]
  %v104 = vld [vmem:[%s1 + $0x1b8] sm:$0xff]
  %v105 = vld [vmem:[%s1 + $0x1c0] sm:$0xff]
  %v106 = vld [vmem:[%s1 + $0x1c8] sm:$0xff]
  %v107 = vld [vmem:[%s1 + $0x1d0] sm:$0xff]
  %v108 = vld [vmem:[%s1 + $0x1d8] sm:$0xff]
  %v109 = vld [vmem:[%s1 + $0x1e0] sm:$0xff]
  %v110 = vld [vmem:[%s1 + $0x1e8] sm:$0xff]
  %v111 = vld [vmem:[%s1 + $0x1f0] sm:$0xff]
  %v112 = vld [vmem:[%s1 + $0x1f8] sm:$0xff]
  %v113 = vld [vmem:[%s1 + $0x200] sm:$0xff]
  %v114 = vld [vmem:[%s1 + $0x208] sm:$0xff]
  %v115 = vld [vmem:[%s1 + $0x210] sm:$0xff]
  %v116 = vld [vmem:[%s1 + $0x218] sm:$0xff]
  %v117 = vld [vmem:[%s1 + $0x220] sm:$0xff]
  %v118 = vld [vmem:[%s1 + $0x228] sm:$0xff]
  %v119 = vld [vmem:[%s1 + $0x230] sm:$0xff]
  %v120 = vld [vmem:[%s1 + $0x238] sm:$0xff]
  %v121 = vld [vmem:[%s1 + $0x240] sm:$0xff]
  %v122 = vld [vmem:[%s1 + $0x248] sm:$0xff]
  %v123 = vld [vmem:[%s1 + $0x250] sm:$0xff]
  %v124 = vld [vmem:[%s1 + $0x258] sm:$0xff]
  %v125 = vld [vmem:[%s1 + $0x260] sm:$0xff]
  %v126 = vld [vmem:[%s1 + $0x268] sm:$0xff]
  %v127 = vld [vmem:[%s1 + $0x270] sm:$0xff]
  %v128 = vld [vmem:[%s1 + $0x278] sm:$0xff]
  %v129 = vld [vmem:[%s1 + $0x280] sm:$0xff]
  %v130 = vld [vmem:[%s1 + $0x288] sm:$0xff]
  %v131 = vld [vmem:[%s1 + $0x290] sm:$0xff]
  %v132 = vld [vmem:[%s1 + $0x298] sm:$0xff]
  %v133 = vld [vmem:[%s1 + $0x2a0] sm:$0xff]
  %v134 = vld [vmem:[%s1 + $0x2a8] sm:$0xff]
  %v135 = vld [vmem:[%s1 + $0x2b0] sm:$0xff]
  %v136 = vld [vmem:[%s1 + $0x2b8] sm:$0xff]
  %v137 = vld [vmem:[%s1 + $0x2c0] sm:$0xff]
  %v138 = vld [vmem:[%s1 + $0x2c8] sm:$0xff]
  %v139 = vld [vmem:[%s1 + $0x2d0] sm:$0xff]
  %v140 = vld [vmem:[%s1 + $0x2d8] sm:$0xff]
  %v141 = vld [vmem:[%s1 + $0x2e0] sm:$0xff]
  %v142 = vld [vmem:[%s1 + $0x2e8] sm:$0xff]
  %v143 = vld [vmem:[%s1 + $0x2f0] sm:$0xff]
  %v144 = vld [vmem:[%s1 + $0x2f8] sm:$0xff]
  %v177 = vunpack.c.l.b16 %v17
  %v178 = vunpack.c.h.b16 %v17
  %v179 = vunpack.c.l.b16 %v18
  %v180 = vunpack.c.l.b16 %v19
  %v181 = vunpack.c.h.b16 %v19
  %v182 = vunpack.c.l.b16 %v20
  %v183 = vunpack.c.l.b16 %v21
  %v184 = vunpack.c.h.b16 %v21
  %v185 = vunpack.c.l.b16 %v22
  %v186 = vunpack.c.l.b16 %v23
  %v187 = vunpack.c.h.b16 %v23
  %v188 = vunpack.c.l.b16 %v24
  %v189 = vunpack.c.l.b16 %v25
  %v190 = vunpack.c.h.b16 %v25
  %v191 = vunpack.c.l.b16 %v26
  %v192 = vunpack.c.l.b16 %v27
  %v193 = vunpack.c.h.b16 %v27
  %v194 = vunpack.c.l.b16 %v28
  %v195 = vunpack.c.l.b16 %v29
  %v196 = vunpack.c.h.b16 %v29
  %v197 = vunpack.c.l.b16 %v30
  %v198 = vunpack.c.l.b16 %v31
  %v199 = vunpack.c.h.b16 %v31
  %v200 = vunpack.c.l.b16 %v32
  %v201 = vunpack.c.l.b16 %v33
  %v202 = vunpack.c.h.b16 %v33
  %v203 = vunpack.c.l.b16 %v34
  %v204 = vunpack.c.l.b16 %v35
  %v205 = vunpack.c.h.b16 %v35
  %v206 = vunpack.c.l.b16 %v36
  %v207 = vunpack.c.l.b16 %v37
  %v208 = vunpack.c.h.b16 %v37
  %v209 = vunpack.c.l.b16 %v38
  %v210 = vunpack.c.l.b16 %v39
  %v211 = vunpack.c.h.b16 %v39
  %v212 = vunpack.c.l.b16 %v40
  %v213 = vunpack.c.l.b16 %v41
  %v214 = vunpack.c.h.b16 %v41
  %v215 = vunpack.c.l.b16 %v42
  %v216 = vunpack.c.l.b16 %v43
  %v217 = vunpack.c.h.b16 %v43
  %v218 = vunpack.c.l.b16 %v44
  %v219 = vunpack.c.l.b16 %v45
  %v220 = vunpack.c.h.b16 %v45
  %v221 = vunpack.c.l.b16 %v46
  %v222 = vunpack.c.l.b16 %v47
  %v223 = vunpack.c.h.b16 %v47
  %v224 = vunpack.c.l.b16 %v48
  %v225 = vpack.c.b16 %v180, %v177
  %v226 = vpack.c.b16 %v181, %v178
  %v227 = vpack.c.b16 %v182, %v179
  %v228 = vpack.c.b16 %v186, %v183
  %v229 = vpack.c.b16 %v187, %v184
  %v230 = vpack.c.b16 %v188, %v185
  %v231 = vpack.c.b16 %v192, %v189
  %v232 = vpack.c.b16 %v193, %v190
  %v233 = vpack.c.b16 %v194, %v191
  %v234 = vpack.c.b16 %v198, %v195
  %v235 = vpack.c.b16 %v199, %v196
  %v236 = vpack.c.b16 %v200, %v197
  %v237 = vpack.c.b16 %v204, %v201
  %v238 = vpack.c.b16 %v205, %v202
  %v239 = vpack.c.b16 %v206, %v203
  %v240 = vpack.c.b16 %v210, %v207
  %v241 = vpack.c.b16 %v211, %v208
  %v242 = vpack.c.b16 %v212, %v209
  %v243 = vpack.c.b16 %v216, %v213
  %v244 = vpack.c.b16 %v217, %v214
  %v245 = vpack.c.b16 %v218, %v215
  %v246 = vpack.c.b16 %v222, %v219
  %v247 = vpack.c.b16 %v223, %v220
  %v248 = vpack.c.b16 %v224, %v221
  %v369 = vunpack.c.l.b16 %v49
  %v370 = vunpack.c.h.b16 %v49
  %v371 = vunpack.c.l.b16 %v50
  %v372 = vunpack.c.h.b16 %v50
  %v373 = vunpack.c.l.b16 %v51
  %v374 = vunpack.c.h.b16 %v51
  %v375 = vunpack.c.l.b16 %v52
  %v376 = vunpack.c.h.b16 %v52
  %v377 = vunpack.c.l.b16 %v53
  %v378 = vunpack.c.h.b16 %v53
  %v379 = vunpack.c.l.b16 %v54
  %v380 = vunpack.c.h.b16 %v54
  %v381 = vunpack.c.l.b16 %v55
  %v382 = vunpack.c.h.b16 %v55
  %v383 = vunpack.c.l.b16 %v56
  %v384 = vunpack.c.h.b16 %v56
  %v385 = vunpack.c.l.b16 %v57
  %v386 = vunpack.c.h.b16 %v57
  %v387 = vunpack.c.l.b16 %v58
  %v388 = vunpack.c.h.b16 %v58
  %v389 = vunpack.c.l.b16 %v59
  %v390 = vunpack.c.h.b16 %v59
  %v391 = vunpack.c.l.b16 %v60
  %v392 = vunpack.c.h.b16 %v60
  %v393 = vunpack.c.l.b16 %v61
  %v394 = vunpack.c.h.b16 %v61
  %v395 = vunpack.c.l.b16 %v62
  %v396 = vunpack.c.h.b16 %v62
  %v397 = vunpack.c.l.b16 %v63
  %v398 = vunpack.c.h.b16 %v63
  %v399 = vunpack.c.l.b16 %v64
  %v400 = vunpack.c.h.b16 %v64
  %v401 = vunpack.c.l.b16 %v65
  %v402 = vunpack.c.h.b16 %v65
  %v403 = vunpack.c.l.b16 %v66
  %v404 = vunpack.c.h.b16 %v66
  %v405 = vunpack.c.l.b16 %v67
  %v406 = vunpack.c.h.b16 %v67
  %v407 = vunpack.c.l.b16 %v68
  %v408 = vunpack.c.h.b16 %v68
  %v409 = vunpack.c.l.b16 %v69
  %v410 = vunpack.c.h.b16 %v69
  %v411 = vunpack.c.l.b16 %v70
  %v412 = vunpack.c.h.b16 %v70
  %v413 = vunpack.c.l.b16 %v71
  %v414 = vunpack.c.h.b16 %v71
  %v415 = vunpack.c.l.b16 %v72
  %v416 = vunpack.c.h.b16 %v72
  %v417 = vunpack.c.l.b16 %v73
  %v418 = vunpack.c.h.b16 %v73
  %v419 = vunpack.c.l.b16 %v74
  %v420 = vunpack.c.h.b16 %v74
  %v421 = vunpack.c.l.b16 %v75
  %v422 = vunpack.c.h.b16 %v75
  %v423 = vunpack.c.l.b16 %v76
  %v424 = vunpack.c.h.b16 %v76
  %v425 = vunpack.c.l.b16 %v77
  %v426 = vunpack.c.h.b16 %v77
  %v427 = vunpack.c.l.b16 %v78
  %v428 = vunpack.c.h.b16 %v78
  %v429 = vunpack.c.l.b16 %v79
  %v430 = vunpack.c.h.b16 %v79
  %v431 = vunpack.c.l.b16 %v80
  %v432 = vunpack.c.h.b16 %v80
  %v433 = vunpack.c.l.b16 %v81
  %v434 = vunpack.c.h.b16 %v81
  %v435 = vunpack.c.l.b16 %v82
  %v436 = vunpack.c.h.b16 %v82
  %v437 = vunpack.c.l.b16 %v83
  %v438 = vunpack.c.h.b16 %v83
  %v439 = vunpack.c.l.b16 %v84
  %v440 = vunpack.c.h.b16 %v84
  %v441 = vunpack.c.l.b16 %v85
  %v442 = vunpack.c.h.b16 %v85
  %v443 = vunpack.c.l.b16 %v86
  %v444 = vunpack.c.h.b16 %v86
  %v445 = vunpack.c.l.b16 %v87
  %v446 = vunpack.c.h.b16 %v87
  %v447 = vunpack.c.l.b16 %v88
  %v448 = vunpack.c.h.b16 %v88
  %v449 = vunpack.c.l.b16 %v89
  %v450 = vunpack.c.h.b16 %v89
  %v451 = vunpack.c.l.b16 %v90
  %v452 = vunpack.c.h.b16 %v90
  %v453 = vunpack.c.l.b16 %v91
  %v454 = vunpack.c.h.b16 %v91
  %v455 = vunpack.c.l.b16 %v92
  %v456 = vunpack.c.h.b16 %v92
  %v457 = vunpack.c.l.b16 %v93
  %v458 = vunpack.c.h.b16 %v93
  %v459 = vunpack.c.l.b16 %v94
  %v460 = vunpack.c.h.b16 %v94
  %v461 = vunpack.c.l.b16 %v95
  %v462 = vunpack.c.h.b16 %v95
  %v463 = vunpack.c.l.b16 %v96
  %v464 = vunpack.c.h.b16 %v96
  %v465 = vunpack.c.l.b16 %v97
  %v466 = vunpack.c.h.b16 %v97
  %v467 = vunpack.c.l.b16 %v98
  %v468 = vunpack.c.h.b16 %v98
  %v469 = vunpack.c.l.b16 %v99
  %v470 = vunpack.c.h.b16 %v99
  %v471 = vunpack.c.l.b16 %v100
  %v472 = vunpack.c.h.b16 %v100
  %v473 = vunpack.c.l.b16 %v101
  %v474 = vunpack.c.h.b16 %v101
  %v475 = vunpack.c.l.b16 %v102
  %v476 = vunpack.c.h.b16 %v102
  %v477 = vunpack.c.l.b16 %v103
  %v478 = vunpack.c.h.b16 %v103
  %v479 = vunpack.c.l.b16 %v104
  %v480 = vunpack.c.h.b16 %v104
  %v481 = vunpack.c.l.b16 %v105
  %v482 = vunpack.c.h.b16 %v105
  %v483 = vunpack.c.l.b16 %v106
  %v484 = vunpack.c.h.b16 %v106
  %v485 = vunpack.c.l.b16 %v107
  %v486 = vunpack.c.h.b16 %v107
  %v487 = vunpack.c.l.b16 %v108
  %v488 = vunpack.c.h.b16 %v108
  %v489 = vunpack.c.l.b16 %v109
  %v490 = vunpack.c.h.b16 %v109
  %v491 = vunpack.c.l.b16 %v110
  %v492 = vunpack.c.h.b16 %v110
  %v493 = vunpack.c.l.b16 %v111
  %v494 = vunpack.c.h.b16 %v111
  %v495 = vunpack.c.l.b16 %v112
  %v496 = vunpack.c.h.b16 %v112
  %v497 = vunpack.c.l.b16 %v113
  %v498 = vunpack.c.h.b16 %v113
  %v499 = vunpack.c.l.b16 %v114
  %v500 = vunpack.c.h.b16 %v114
  %v501 = vunpack.c.l.b16 %v115
  %v502 = vunpack.c.h.b16 %v115
  %v503 = vunpack.c.l.b16 %v116
  %v504 = vunpack.c.h.b16 %v116
  %v505 = vunpack.c.l.b16 %v117
  %v506 = vunpack.c.h.b16 %v117
  %v507 = vunpack.c.l.b16 %v118
  %v508 = vunpack.c.h.b16 %v118
  %v509 = vunpack.c.l.b16 %v119
  %v510 = vunpack.c.h.b16 %v119
  %v511 = vunpack.c.l.b16 %v120
  %v512 = vunpack.c.h.b16 %v120
  %v513 = vunpack.c.l.b16 %v121
  %v514 = vunpack.c.h.b16 %v121
  %v515 = vunpack.c.l.b16 %v122
  %v516 = vunpack.c.h.b16 %v122
  %v517 = vunpack.c.l.b16 %v123
  %v518 = vunpack.c.h.b16 %v123
  %v519 = vunpack.c.l.b16 %v124
  %v520 = vunpack.c.h.b16 %v124
  %v521 = vunpack.c.l.b16 %v125
  %v522 = vunpack.c.h.b16 %v125
  %v523 = vunpack.c.l.b16 %v126
  %v524 = vunpack.c.h.b16 %v126
  %v525 = vunpack.c.l.b16 %v127
  %v526 = vunpack.c.h.b16 %v127
  %v527 = vunpack.c.l.b16 %v128
  %v528 = vunpack.c.h.b16 %v128
  %v529 = vunpack.c.l.b16 %v129
  %v530 = vunpack.c.h.b16 %v129
  %v531 = vunpack.c.l.b16 %v130
  %v532 = vunpack.c.h.b16 %v130
  %v533 = vunpack.c.l.b16 %v131
  %v534 = vunpack.c.h.b16 %v131
  %v535 = vunpack.c.l.b16 %v132
  %v536 = vunpack.c.h.b16 %v132
  %v537 = vunpack.c.l.b16 %v133
  %v538 = vunpack.c.h.b16 %v133
  %v539 = vunpack.c.l.b16 %v134
  %v540 = vunpack.c.h.b16 %v134
  %v541 = vunpack.c.l.b16 %v135
  %v542 = vunpack.c.h.b16 %v135
  %v543 = vunpack.c.l.b16 %v136
  %v544 = vunpack.c.h.b16 %v136
  %v545 = vunpack.c.l.b16 %v137
  %v546 = vunpack.c.h.b16 %v137
  %v547 = vunpack.c.l.b16 %v138
  %v548 = vunpack.c.h.b16 %v138
  %v549 = vunpack.c.l.b16 %v139
  %v550 = vunpack.c.h.b16 %v139
  %v551 = vunpack.c.l.b16 %v140
  %v552 = vunpack.c.h.b16 %v140
  %v553 = vunpack.c.l.b16 %v141
  %v554 = vunpack.c.h.b16 %v141
  %v555 = vunpack.c.l.b16 %v142
  %v556 = vunpack.c.h.b16 %v142
  %v557 = vunpack.c.l.b16 %v143
  %v558 = vunpack.c.h.b16 %v143
  %v559 = vunpack.c.l.b16 %v144
  %v560 = vunpack.c.h.b16 %v144
  %v561 = vpack.c.b16 %v373, %v369
  %v562 = vpack.c.b16 %v374, %v370
  %v563 = vpack.c.b16 %v375, %v371
  %v564 = vpack.c.b16 %v376, %v372
  %v565 = vpack.c.b16 %v381, %v377
  %v566 = vpack.c.b16 %v382, %v378
  %v567 = vpack.c.b16 %v383, %v379
  %v568 = vpack.c.b16 %v384, %v380
  %v569 = vpack.c.b16 %v389, %v385
  %v570 = vpack.c.b16 %v390, %v386
  %v571 = vpack.c.b16 %v391, %v387
  %v572 = vpack.c.b16 %v392, %v388
  %v573 = vpack.c.b16 %v397, %v393
  %v574 = vpack.c.b16 %v398, %v394
  %v575 = vpack.c.b16 %v399, %v395
  %v576 = vpack.c.b16 %v400, %v396
  %v577 = vpack.c.b16 %v405, %v401
  %v578 = vpack.c.b16 %v406, %v402
  %v579 = vpack.c.b16 %v407, %v403
  %v580 = vpack.c.b16 %v408, %v404
  %v581 = vpack.c.b16 %v413, %v409
  %v582 = vpack.c.b16 %v414, %v410
  %v583 = vpack.c.b16 %v415, %v411
  %v584 = vpack.c.b16 %v416, %v412
  %v585 = vpack.c.b16 %v421, %v417
  %v586 = vpack.c.b16 %v422, %v418
  %v587 = vpack.c.b16 %v423, %v419
  %v588 = vpack.c.b16 %v424, %v420
  %v589 = vpack.c.b16 %v429, %v425
  %v590 = vpack.c.b16 %v430, %v426
  %v591 = vpack.c.b16 %v431, %v427
  %v592 = vpack.c.b16 %v432, %v428
  %v593 = vpack.c.b16 %v437, %v433
  %v594 = vpack.c.b16 %v438, %v434
  %v595 = vpack.c.b16 %v439, %v435
  %v596 = vpack.c.b16 %v440, %v436
  %v597 = vpack.c.b16 %v445, %v441
  %v598 = vpack.c.b16 %v446, %v442
  %v599 = vpack.c.b16 %v447, %v443
  %v600 = vpack.c.b16 %v448, %v444
  %v601 = vpack.c.b16 %v453, %v449
  %v602 = vpack.c.b16 %v454, %v450
  %v603 = vpack.c.b16 %v455, %v451
  %v604 = vpack.c.b16 %v456, %v452
  %v605 = vpack.c.b16 %v461, %v457
  %v606 = vpack.c.b16 %v462, %v458
  %v607 = vpack.c.b16 %v463, %v459
  %v608 = vpack.c.b16 %v464, %v460
  %v609 = vpack.c.b16 %v469, %v465
  %v610 = vpack.c.b16 %v470, %v466
  %v611 = vpack.c.b16 %v471, %v467
  %v612 = vpack.c.b16 %v472, %v468
  %v613 = vpack.c.b16 %v477, %v473
  %v614 = vpack.c.b16 %v478, %v474
  %v615 = vpack.c.b16 %v479, %v475
  %v616 = vpack.c.b16 %v480, %v476
  %v617 = vpack.c.b16 %v485, %v481
  %v618 = vpack.c.b16 %v486, %v482
  %v619 = vpack.c.b16 %v487, %v483
  %v620 = vpack.c.b16 %v488, %v484
  %v621 = vpack.c.b16 %v493, %v489
  %v622 = vpack.c.b16 %v494, %v490
  %v623 = vpack.c.b16 %v495, %v491
  %v624 = vpack.c.b16 %v496, %v492
  %v625 = vpack.c.b16 %v501, %v497
  %v626 = vpack.c.b16 %v502, %v498
  %v627 = vpack.c.b16 %v503, %v499
  %v628 = vpack.c.b16 %v504, %v500
  %v629 = vpack.c.b16 %v509, %v505
  %v630 = vpack.c.b16 %v510, %v506
  %v631 = vpack.c.b16 %v511, %v507
  %v632 = vpack.c.b16 %v512, %v508
  %v633 = vpack.c.b16 %v517, %v513
  %v634 = vpack.c.b16 %v518, %v514
  %v635 = vpack.c.b16 %v519, %v515
  %v636 = vpack.c.b16 %v520, %v516
  %v637 = vpack.c.b16 %v525, %v521
  %v638 = vpack.c.b16 %v526, %v522
  %v639 = vpack.c.b16 %v527, %v523
  %v640 = vpack.c.b16 %v528, %v524
  %v641 = vpack.c.b16 %v533, %v529
  %v642 = vpack.c.b16 %v534, %v530
  %v643 = vpack.c.b16 %v535, %v531
  %v644 = vpack.c.b16 %v536, %v532
  %v645 = vpack.c.b16 %v541, %v537
  %v646 = vpack.c.b16 %v542, %v538
  %v647 = vpack.c.b16 %v543, %v539
  %v648 = vpack.c.b16 %v544, %v540
  %v649 = vpack.c.b16 %v549, %v545
  %v650 = vpack.c.b16 %v550, %v546
  %v651 = vpack.c.b16 %v551, %v547
  %v652 = vpack.c.b16 %v552, %v548
  %v653 = vpack.c.b16 %v557, %v553
  %v654 = vpack.c.b16 %v558, %v554
  %v655 = vpack.c.b16 %v559, %v555
  %v656 = vpack.c.b16 %v560, %v556
  %753 = vmatprep.subr.bf16.mxu0 %v562
  %754 = vmatpush1.bf16.msra.mxu0 %v561
  %755 = vmatprep.subr.bf16.mxu0 %v566
  %756 = vmatpush1.bf16.msra.mxu0 %v565
  %757 = vmatprep.subr.bf16.mxu0 %v570
  %758 = vmatpush1.bf16.msra.mxu0 %v569
  %759 = vmatprep.subr.bf16.mxu0 %v574
  %760 = vmatpush1.bf16.msra.mxu0 %v573
  %761 = vmatprep.subr.bf16.mxu0 %v578
  %762 = vmatpush1.bf16.msra.mxu0 %v577
  %763 = vmatprep.subr.bf16.mxu0 %v582
  %764 = vmatpush1.bf16.msra.mxu0 %v581
  %765 = vmatprep.subr.bf16.mxu0 %v586
  %766 = vmatpush1.bf16.msra.mxu0 %v585
  %767 = vmatprep.subr.bf16.mxu0 %v590
  %768 = vmatpush1.bf16.msra.mxu0 %v589
  %769 = vmatprep.subr.bf16.mxu0 %v594
  %770 = vmatpush1.bf16.msra.mxu0 %v593
  %771 = vmatprep.subr.bf16.mxu0 %v598
  %772 = vmatpush1.bf16.msra.mxu0 %v597
  %773 = vmatprep.subr.bf16.mxu0 %v602
  %774 = vmatpush1.bf16.msra.mxu0 %v601
  %775 = vmatprep.subr.bf16.mxu0 %v606
  %776 = vmatpush1.bf16.msra.mxu0 %v605
  %777 = vmatprep.subr.bf16.mxu0 %v610
  %778 = vmatpush1.bf16.msra.mxu0 %v609
  %779 = vmatprep.subr.bf16.mxu0 %v614
  %780 = vmatpush1.bf16.msra.mxu0 %v613
  %781 = vmatprep.subr.bf16.mxu0 %v618
  %782 = vmatpush1.bf16.msra.mxu0 %v617
  %783 = vmatprep.subr.bf16.mxu0 %v622
  %784 = vmatpush1.bf16.msra.mxu0 %v621
  %785 = vmatprep.mubr.bf16.mxu0 %v226
  %786 = vmatmul.mubr.bf16.gmra.mrb[0].mxu0 %v225
  %v787 = vpop.f32.mrb[0].mxu0
  %v788 = vadd.f32 0.0, %v787
  %v789 = vpop.f32.mrb[0].mxu0
  %v790 = vadd.f32 0.0, %v789
  %v791 = vpop.f32.mrb[0].mxu0
  %v792 = vadd.f32 0.0, %v791
  %v793 = vpop.f32.mrb[0].mxu0
  %v794 = vadd.f32 0.0, %v793
  %795 = vmatprep.mubr.bf16.mxu0 %v229
  %796 = vmatmul.mubr.bf16.gmra.mrb[0].mxu0 %v228
  %v797 = vpop.f32.mrb[0].mxu0
  %v798 = vadd.f32 0.0, %v797
  %v799 = vpop.f32.mrb[0].mxu0
  %v800 = vadd.f32 0.0, %v799
  %v801 = vpop.f32.mrb[0].mxu0
  %v802 = vadd.f32 0.0, %v801
  %v803 = vpop.f32.mrb[0].mxu0
  %v804 = vadd.f32 0.0, %v803
  %805 = vmatprep.mubr.bf16.mxu0 %v232
  %806 = vmatmul.mubr.bf16.gmra.mrb[0].mxu0 %v231
  %v807 = vpop.f32.mrb[0].mxu0
  %v808 = vadd.f32 0.0, %v807
  %v809 = vpop.f32.mrb[0].mxu0
  %v810 = vadd.f32 0.0, %v809
  %v811 = vpop.f32.mrb[0].mxu0
  %v812 = vadd.f32 0.0, %v811
  %v813 = vpop.f32.mrb[0].mxu0
  %v814 = vadd.f32 0.0, %v813
  %815 = vmatprep.mubr.bf16.mxu0 %v235
  %816 = vmatmul.mubr.bf16.gmra.mrb[0].mxu0 %v234
  %v817 = vpop.f32.mrb[0].mxu0
  %v818 = vadd.f32 0.0, %v817
  %v819 = vpop.f32.mrb[0].mxu0
  %v820 = vadd.f32 0.0, %v819
  %v821 = vpop.f32.mrb[0].mxu0
  %v822 = vadd.f32 0.0, %v821
  %v823 = vpop.f32.mrb[0].mxu0
  %v824 = vadd.f32 0.0, %v823
  %825 = vmatprep.mubr.bf16.mxu0 %v238
  %826 = vmatmul.mubr.bf16.gmra.mrb[0].mxu0 %v237
  %v827 = vpop.f32.mrb[0].mxu0
  %v828 = vadd.f32 0.0, %v827
  %v829 = vpop.f32.mrb[0].mxu0
  %v830 = vadd.f32 0.0, %v829
  %v831 = vpop.f32.mrb[0].mxu0
  %v832 = vadd.f32 0.0, %v831
  %v833 = vpop.f32.mrb[0].mxu0
  %v834 = vadd.f32 0.0, %v833
  %835 = vmatprep.mubr.bf16.mxu0 %v241
  %836 = vmatmul.mubr.bf16.gmra.mrb[0].mxu0 %v240
  %v837 = vpop.f32.mrb[0].mxu0
  %v838 = vadd.f32 0.0, %v837
  %v839 = vpop.f32.mrb[0].mxu0
  %v840 = vadd.f32 0.0, %v839
  %v841 = vpop.f32.mrb[0].mxu0
  %v842 = vadd.f32 0.0, %v841
  %v843 = vpop.f32.mrb[0].mxu0
  %v844 = vadd.f32 0.0, %v843
  %845 = vmatprep.mubr.bf16.mxu0 %v244
  %846 = vmatmul.mubr.bf16.gmra.mrb[0].mxu0 %v243
  %v847 = vpop.f32.mrb[0].mxu0
  %v848 = vadd.f32 0.0, %v847
  %v849 = vpop.f32.mrb[0].mxu0
  %v850 = vadd.f32 0.0, %v849
  %v851 = vpop.f32.mrb[0].mxu0
  %v852 = vadd.f32 0.0, %v851
  %v853 = vpop.f32.mrb[0].mxu0
  %v854 = vadd.f32 0.0, %v853
  %855 = vmatprep.mubr.bf16.mxu0 %v247
  %856 = vmatmul.mubr.bf16.gmra.mrb[0].mxu0 %v246
  %v857 = vpop.f32.mrb[0].mxu0
  %v858 = vadd.f32 0.0, %v857
  %v859 = vpop.f32.mrb[0].mxu0
  %v860 = vadd.f32 0.0, %v859
  %v861 = vpop.f32.mrb[0].mxu0
  %v862 = vadd.f32 0.0, %v861
  %v863 = vpop.f32.mrb[0].mxu0
  %v864 = vadd.f32 0.0, %v863
  %865 = vdwg.mxu0
  %866 = vmatprep.subr.bf16.mxu0 %v626
  %867 = vmatpush1.bf16.msra.mxu0 %v625
  %868 = vmatprep.subr.bf16.mxu0 %v630
  %869 = vmatpush1.bf16.msra.mxu0 %v629
  %870 = vmatprep.subr.bf16.mxu0 %v634
  %871 = vmatpush1.bf16.msra.mxu0 %v633
  %872 = vmatprep.subr.bf16.mxu0 %v638
  %873 = vmatpush1.bf16.msra.mxu0 %v637
  %874 = vmatprep.subr.bf16.mxu0 %v642
  %875 = vmatpush1.bf16.msra.mxu0 %v641
  %876 = vmatprep.subr.bf16.mxu0 %v646
  %877 = vmatpush1.bf16.msra.mxu0 %v645
  %878 = vmatprep.subr.bf16.mxu0 %v650
  %879 = vmatpush1.bf16.msra.mxu0 %v649
  %880 = vmatprep.subr.bf16.mxu0 %v654
  %881 = vmatpush1.bf16.msra.mxu0 %v653
  %882 = vmatprep.subr.bf16.mxu0 0
  %883 = vmatpush1.bf16.msra.mxu0 0
  %884 = vmatprep.subr.bf16.mxu0 0
  %885 = vmatpush1.bf16.msra.mxu0 0
  %886 = vmatprep.subr.bf16.mxu0 0
  %887 = vmatpush1.bf16.msra.mxu0 0
  %888 = vmatprep.subr.bf16.mxu0 0
  %889 = vmatpush1.bf16.msra.mxu0 0
  %890 = vmatprep.subr.bf16.mxu0 0
  %891 = vmatpush1.bf16.msra.mxu0 0
  %892 = vmatprep.subr.bf16.mxu0 0
  %893 = vmatpush1.bf16.msra.mxu0 0
  %894 = vmatprep.subr.bf16.mxu0 0
  %895 = vmatpush1.bf16.msra.mxu0 0
  %896 = vmatprep.subr.bf16.mxu0 0
  %897 = vmatpush1.bf16.msra.mxu0 0
  %898 = vmatprep.mubr.bf16.mxu0 0
  %899 = vmatmul.mubr.bf16.gmra.mrb[0].mxu0 %v227
  %v900 = vpop.f32.mrb[0].mxu0
  %v901 = vadd.f32 %v788, %v900
  %v902 = vpop.f32.mrb[0].mxu0
  %v903 = vadd.f32 %v790, %v902
  %v904 = vpop.f32.mrb[0].mxu0
  %v905 = vadd.f32 %v792, %v904
  %v906 = vpop.f32.mrb[0].mxu0
  %v907 = vadd.f32 %v794, %v906
  %908 = vmatprep.mubr.bf16.mxu0 0
  %909 = vmatmul.mubr.bf16.gmra.mrb[0].mxu0 %v230
  %v910 = vpop.f32.mrb[0].mxu0
  %v911 = vadd.f32 %v798, %v910
  %v912 = vpop.f32.mrb[0].mxu0
  %v913 = vadd.f32 %v800, %v912
  %v914 = vpop.f32.mrb[0].mxu0
  %v915 = vadd.f32 %v802, %v914
  %v916 = vpop.f32.mrb[0].mxu0
  %v917 = vadd.f32 %v804, %v916
  %918 = vmatprep.mubr.bf16.mxu0 0
  %919 = vmatmul.mubr.bf16.gmra.mrb[0].mxu0 %v233
  %v920 = vpop.f32.mrb[0].mxu0
  %v921 = vadd.f32 %v808, %v920
  %v922 = vpop.f32.mrb[0].mxu0
  %v923 = vadd.f32 %v810, %v922
  %v924 = vpop.f32.mrb[0].mxu0
  %v925 = vadd.f32 %v812, %v924
  %v926 = vpop.f32.mrb[0].mxu0
  %v927 = vadd.f32 %v814, %v926
  %928 = vmatprep.mubr.bf16.mxu0 0
  %929 = vmatmul.mubr.bf16.gmra.mrb[0].mxu0 %v236
  %v930 = vpop.f32.mrb[0].mxu0
  %v931 = vadd.f32 %v818, %v930
  %v932 = vpop.f32.mrb[0].mxu0
  %v933 = vadd.f32 %v820, %v932
  %v934 = vpop.f32.mrb[0].mxu0
  %v935 = vadd.f32 %v822, %v934
  %v936 = vpop.f32.mrb[0].mxu0
  %v937 = vadd.f32 %v824, %v936
  %938 = vmatprep.mubr.bf16.mxu0 0
  %939 = vmatmul.mubr.bf16.gmra.mrb[0].mxu0 %v239
  %v940 = vpop.f32.mrb[0].mxu0
  %v941 = vadd.f32 %v828, %v940
  %v942 = vpop.f32.mrb[0].mxu0
  %v943 = vadd.f32 %v830, %v942
  %v944 = vpop.f32.mrb[0].mxu0
  %v945 = vadd.f32 %v832, %v944
  %v946 = vpop.f32.mrb[0].mxu0
  %v947 = vadd.f32 %v834, %v946
  %948 = vmatprep.mubr.bf16.mxu0 0
  %949 = vmatmul.mubr.bf16.gmra.mrb[0].mxu0 %v242
  %v950 = vpop.f32.mrb[0].mxu0
  %v951 = vadd.f32 %v838, %v950
  %v952 = vpop.f32.mrb[0].mxu0
  %v953 = vadd.f32 %v840, %v952
  %v954 = vpop.f32.mrb[0].mxu0
  %v955 = vadd.f32 %v842, %v954
  %v956 = vpop.f32.mrb[0].mxu0
  %v957 = vadd.f32 %v844, %v956
  %958 = vmatprep.mubr.bf16.mxu0 0
  %959 = vmatmul.mubr.bf16.gmra.mrb[0].mxu0 %v245
  %v960 = vpop.f32.mrb[0].mxu0
  %v961 = vadd.f32 %v848, %v960
  %v962 = vpop.f32.mrb[0].mxu0
  %v963 = vadd.f32 %v850, %v962
  %v964 = vpop.f32.mrb[0].mxu0
  %v965 = vadd.f32 %v852, %v964
  %v966 = vpop.f32.mrb[0].mxu0
  %v967 = vadd.f32 %v854, %v966
  %968 = vmatprep.mubr.bf16.mxu0 0
  %969 = vmatmul.mubr.bf16.gmra.mrb[0].mxu0 %v248
  %v970 = vpop.f32.mrb[0].mxu0
  %v971 = vadd.f32 %v858, %v970
  %v972 = vpop.f32.mrb[0].mxu0
  %v973 = vadd.f32 %v860, %v972
  %v974 = vpop.f32.mrb[0].mxu0
  %v975 = vadd.f32 %v862, %v974
  %v976 = vpop.f32.mrb[0].mxu0
  %v977 = vadd.f32 %v864, %v976
  %978 = vdwg.mxu0
  %979 = vmatprep.subr.bf16.mxu0 %v564
  %980 = vmatpush1.bf16.msra.mxu0 %v563
  %981 = vmatprep.subr.bf16.mxu0 %v568
  %982 = vmatpush1.bf16.msra.mxu0 %v567
  %983 = vmatprep.subr.bf16.mxu0 %v572
  %984 = vmatpush1.bf16.msra.mxu0 %v571
  %985 = vmatprep.subr.bf16.mxu0 %v576
  %986 = vmatpush1.bf16.msra.mxu0 %v575
  %987 = vmatprep.subr.bf16.mxu0 %v580
  %988 = vmatpush1.bf16.msra.mxu0 %v579
  %989 = vmatprep.subr.bf16.mxu0 %v584
  %990 = vmatpush1.bf16.msra.mxu0 %v583
  %991 = vmatprep.subr.bf16.mxu0 %v588
  %992 = vmatpush1.bf16.msra.mxu0 %v587
  %993 = vmatprep.subr.bf16.mxu0 %v592
  %994 = vmatpush1.bf16.msra.mxu0 %v591
  %995 = vmatprep.subr.bf16.mxu0 %v596
  %996 = vmatpush1.bf16.msra.mxu0 %v595
  %997 = vmatprep.subr.bf16.mxu0 %v600
  %998 = vmatpush1.bf16.msra.mxu0 %v599
  %999 = vmatprep.subr.bf16.mxu0 %v604
  %1000 = vmatpush1.bf16.msra.mxu0 %v603
  %1001 = vmatprep.subr.bf16.mxu0 %v608
  %1002 = vmatpush1.bf16.msra.mxu0 %v607
  %1003 = vmatprep.subr.bf16.mxu0 %v612
  %1004 = vmatpush1.bf16.msra.mxu0 %v611
  %1005 = vmatprep.subr.bf16.mxu0 %v616
  %1006 = vmatpush1.bf16.msra.mxu0 %v615
  %1007 = vmatprep.subr.bf16.mxu0 %v620
  %1008 = vmatpush1.bf16.msra.mxu0 %v619
  %1009 = vmatprep.subr.bf16.mxu0 %v624
  %1010 = vmatpush1.bf16.msra.mxu0 %v623
  %1011 = vmatprep.mubr.bf16.mxu0 %v226
  %1012 = vmatmul.mubr.bf16.gmra.mrb[0].mxu0 %v225
  %v1013 = vpop.f32.mrb[0].mxu0
  %v1014 = vadd.f32 0.0, %v1013
  %v1015 = vpop.f32.mrb[0].mxu0
  %v1016 = vadd.f32 0.0, %v1015
  %v1017 = vpop.f32.mrb[0].mxu0
  %v1018 = vadd.f32 0.0, %v1017
  %v1019 = vpop.f32.mrb[0].mxu0
  %v1020 = vadd.f32 0.0, %v1019
  %1021 = vmatprep.mubr.bf16.mxu0 %v229
  %1022 = vmatmul.mubr.bf16.gmra.mrb[0].mxu0 %v228
  %v1023 = vpop.f32.mrb[0].mxu0
  %v1024 = vadd.f32 0.0, %v1023
  %v1025 = vpop.f32.mrb[0].mxu0
  %v1026 = vadd.f32 0.0, %v1025
  %v1027 = vpop.f32.mrb[0].mxu0
  %v1028 = vadd.f32 0.0, %v1027
  %v1029 = vpop.f32.mrb[0].mxu0
  %v1030 = vadd.f32 0.0, %v1029
  %1031 = vmatprep.mubr.bf16.mxu0 %v232
  %1032 = vmatmul.mubr.bf16.gmra.mrb[0].mxu0 %v231
  %v1033 = vpop.f32.mrb[0].mxu0
  %v1034 = vadd.f32 0.0, %v1033
  %v1035 = vpop.f32.mrb[0].mxu0
  %v1036 = vadd.f32 0.0, %v1035
  %v1037 = vpop.f32.mrb[0].mxu0
  %v1038 = vadd.f32 0.0, %v1037
  %v1039 = vpop.f32.mrb[0].mxu0
  %v1040 = vadd.f32 0.0, %v1039
  %1041 = vmatprep.mubr.bf16.mxu0 %v235
  %1042 = vmatmul.mubr.bf16.gmra.mrb[0].mxu0 %v234
  %v1043 = vpop.f32.mrb[0].mxu0
  %v1044 = vadd.f32 0.0, %v1043
  %v1045 = vpop.f32.mrb[0].mxu0
  %v1046 = vadd.f32 0.0, %v1045
  %v1047 = vpop.f32.mrb[0].mxu0
  %v1048 = vadd.f32 0.0, %v1047
  %v1049 = vpop.f32.mrb[0].mxu0
  %v1050 = vadd.f32 0.0, %v1049
  %1051 = vmatprep.mubr.bf16.mxu0 %v238
  %1052 = vmatmul.mubr.bf16.gmra.mrb[0].mxu0 %v237
  %v1053 = vpop.f32.mrb[0].mxu0
  %v1054 = vadd.f32 0.0, %v1053
  %v1055 = vpop.f32.mrb[0].mxu0
  %v1056 = vadd.f32 0.0, %v1055
  %v1057 = vpop.f32.mrb[0].mxu0
  %v1058 = vadd.f32 0.0, %v1057
  %v1059 = vpop.f32.mrb[0].mxu0
  %v1060 = vadd.f32 0.0, %v1059
  %1061 = vmatprep.mubr.bf16.mxu0 %v241
  %1062 = vmatmul.mubr.bf16.gmra.mrb[0].mxu0 %v240
  %v1063 = vpop.f32.mrb[0].mxu0
  %v1064 = vadd.f32 0.0, %v1063
  %v1065 = vpop.f32.mrb[0].mxu0
  %v1066 = vadd.f32 0.0, %v1065
  %v1067 = vpop.f32.mrb[0].mxu0
  %v1068 = vadd.f32 0.0, %v1067
  %v1069 = vpop.f32.mrb[0].mxu0
  %v1070 = vadd.f32 0.0, %v1069
  %1071 = vmatprep.mubr.bf16.mxu0 %v244
  %1072 = vmatmul.mubr.bf16.gmra.mrb[0].mxu0 %v243
  %v1073 = vpop.f32.mrb[0].mxu0
  %v1074 = vadd.f32 0.0, %v1073
  %v1075 = vpop.f32.mrb[0].mxu0
  %v1076 = vadd.f32 0.0, %v1075
  %v1077 = vpop.f32.mrb[0].mxu0
  %v1078 = vadd.f32 0.0, %v1077
  %v1079 = vpop.f32.mrb[0].mxu0
  %v1080 = vadd.f32 0.0, %v1079
  %1081 = vmatprep.mubr.bf16.mxu0 %v247
  %1082 = vmatmul.mubr.bf16.gmra.mrb[0].mxu0 %v246
  %v1083 = vpop.f32.mrb[0].mxu0
  %v1084 = vadd.f32 0.0, %v1083
  %v1085 = vpop.f32.mrb[0].mxu0
  %v1086 = vadd.f32 0.0, %v1085
  %v1087 = vpop.f32.mrb[0].mxu0
  %v1088 = vadd.f32 0.0, %v1087
  %v1089 = vpop.f32.mrb[0].mxu0
  %v1090 = vadd.f32 0.0, %v1089
  %1091 = vdwg.mxu0
  %1092 = vmatprep.subr.bf16.mxu0 %v628
  %1093 = vmatpush1.bf16.msra.mxu0 %v627
  %1094 = vmatprep.subr.bf16.mxu0 %v632
  %1095 = vmatpush1.bf16.msra.mxu0 %v631
  %1096 = vmatprep.subr.bf16.mxu0 %v636
  %1097 = vmatpush1.bf16.msra.mxu0 %v635
  %1098 = vmatprep.subr.bf16.mxu0 %v640
  %1099 = vmatpush1.bf16.msra.mxu0 %v639
  %1100 = vmatprep.subr.bf16.mxu0 %v644
  %1101 = vmatpush1.bf16.msra.mxu0 %v643
  %1102 = vmatprep.subr.bf16.mxu0 %v648
  %1103 = vmatpush1.bf16.msra.mxu0 %v647
  %1104 = vmatprep.subr.bf16.mxu0 %v652
  %1105 = vmatpush1.bf16.msra.mxu0 %v651
  %1106 = vmatprep.subr.bf16.mxu0 %v656
  %1107 = vmatpush1.bf16.msra.mxu0 %v655
  %1108 = vmatprep.subr.bf16.mxu0 0
  %1109 = vmatpush1.bf16.msra.mxu0 0
  %1110 = vmatprep.subr.bf16.mxu0 0
  %1111 = vmatpush1.bf16.msra.mxu0 0
  %1112 = vmatprep.subr.bf16.mxu0 0
  %1113 = vmatpush1.bf16.msra.mxu0 0
  %1114 = vmatprep.subr.bf16.mxu0 0
  %1115 = vmatpush1.bf16.msra.mxu0 0
  %1116 = vmatprep.subr.bf16.mxu0 0
  %1117 = vmatpush1.bf16.msra.mxu0 0
  %1118 = vmatprep.subr.bf16.mxu0 0
  %1119 = vmatpush1.bf16.msra.mxu0 0
  %1120 = vmatprep.subr.bf16.mxu0 0
  %1121 = vmatpush1.bf16.msra.mxu0 0
  %1122 = vmatprep.subr.bf16.mxu0 0
  %1123 = vmatpush1.bf16.msra.mxu0 0
  %1124 = vmatprep.mubr.bf16.mxu0 0
  %1125 = vmatmul.mubr.bf16.gmra.mrb[0].mxu0 %v227
  %v1126 = vpop.f32.mrb[0].mxu0
  %v1127 = vadd.f32 %v1014, %v1126
  %v1128 = vpop.f32.mrb[0].mxu0
  %v1129 = vadd.f32 %v1016, %v1128
  %v1130 = vpop.f32.mrb[0].mxu0
  %v1131 = vadd.f32 %v1018, %v1130
  %v1132 = vpop.f32.mrb[0].mxu0
  %v1133 = vadd.f32 %v1020, %v1132
  %1134 = vmatprep.mubr.bf16.mxu0 0
  %1135 = vmatmul.mubr.bf16.gmra.mrb[0].mxu0 %v230
  %v1136 = vpop.f32.mrb[0].mxu0
  %v1137 = vadd.f32 %v1024, %v1136
  %v1138 = vpop.f32.mrb[0].mxu0
  %v1139 = vadd.f32 %v1026, %v1138
  %v1140 = vpop.f32.mrb[0].mxu0
  %v1141 = vadd.f32 %v1028, %v1140
  %v1142 = vpop.f32.mrb[0].mxu0
  %v1143 = vadd.f32 %v1030, %v1142
  %1144 = vmatprep.mubr.bf16.mxu0 0
  %1145 = vmatmul.mubr.bf16.gmra.mrb[0].mxu0 %v233
  %v1146 = vpop.f32.mrb[0].mxu0
  %v1147 = vadd.f32 %v1034, %v1146
  %v1148 = vpop.f32.mrb[0].mxu0
  %v1149 = vadd.f32 %v1036, %v1148
  %v1150 = vpop.f32.mrb[0].mxu0
  %v1151 = vadd.f32 %v1038, %v1150
  %v1152 = vpop.f32.mrb[0].mxu0
  %v1153 = vadd.f32 %v1040, %v1152
  %1154 = vmatprep.mubr.bf16.mxu0 0
  %1155 = vmatmul.mubr.bf16.gmra.mrb[0].mxu0 %v236
  %v1156 = vpop.f32.mrb[0].mxu0
  %v1157 = vadd.f32 %v1044, %v1156
  %v1158 = vpop.f32.mrb[0].mxu0
  %v1159 = vadd.f32 %v1046, %v1158
  %v1160 = vpop.f32.mrb[0].mxu0
  %v1161 = vadd.f32 %v1048, %v1160
  %v1162 = vpop.f32.mrb[0].mxu0
  %v1163 = vadd.f32 %v1050, %v1162
  %1164 = vmatprep.mubr.bf16.mxu0 0
  %1165 = vmatmul.mubr.bf16.gmra.mrb[0].mxu0 %v239
  %v1166 = vpop.f32.mrb[0].mxu0
  %v1167 = vadd.f32 %v1054, %v1166
  %v1168 = vpop.f32.mrb[0].mxu0
  %v1169 = vadd.f32 %v1056, %v1168
  %v1170 = vpop.f32.mrb[0].mxu0
  %v1171 = vadd.f32 %v1058, %v1170
  %v1172 = vpop.f32.mrb[0].mxu0
  %v1173 = vadd.f32 %v1060, %v1172
  %1174 = vmatprep.mubr.bf16.mxu0 0
  %1175 = vmatmul.mubr.bf16.gmra.mrb[0].mxu0 %v242
  %v1176 = vpop.f32.mrb[0].mxu0
  %v1177 = vadd.f32 %v1064, %v1176
  %v1178 = vpop.f32.mrb[0].mxu0
  %v1179 = vadd.f32 %v1066, %v1178
  %v1180 = vpop.f32.mrb[0].mxu0
  %v1181 = vadd.f32 %v1068, %v1180
  %v1182 = vpop.f32.mrb[0].mxu0
  %v1183 = vadd.f32 %v1070, %v1182
  %1184 = vmatprep.mubr.bf16.mxu0 0
  %1185 = vmatmul.mubr.bf16.gmra.mrb[0].mxu0 %v245
  %v1186 = vpop.f32.mrb[0].mxu0
  %v1187 = vadd.f32 %v1074, %v1186
  %v1188 = vpop.f32.mrb[0].mxu0
  %v1189 = vadd.f32 %v1076, %v1188
  %v1190 = vpop.f32.mrb[0].mxu0
  %v1191 = vadd.f32 %v1078, %v1190
  %v1192 = vpop.f32.mrb[0].mxu0
  %v1193 = vadd.f32 %v1080, %v1192
  %1194 = vmatprep.mubr.bf16.mxu0 0
  %1195 = vmatmul.mubr.bf16.gmra.mrb[0].mxu0 %v248
  %v1196 = vpop.f32.mrb[0].mxu0
  %v1197 = vadd.f32 %v1084, %v1196
  %v1198 = vpop.f32.mrb[0].mxu0
  %v1199 = vadd.f32 %v1086, %v1198
  %v1200 = vpop.f32.mrb[0].mxu0
  %v1201 = vadd.f32 %v1088, %v1200
  %v1202 = vpop.f32.mrb[0].mxu0
  %v1203 = vadd.f32 %v1090, %v1202
  %1204 = vdwg.mxu0
  %v1205 = vmax.f32 %v901, 0.0
  %v1206 = vmax.f32 %v903, 0.0
  %v1207 = vmax.f32 %v1127, 0.0
  %v1208 = vmax.f32 %v1129, 0.0
  %v1209 = vmax.f32 %v905, 0.0
  %v1210 = vmax.f32 %v907, 0.0
  %v1211 = vmax.f32 %v1131, 0.0
  %v1212 = vmax.f32 %v1133, 0.0
  %v1213 = vmax.f32 %v911, 0.0
  %v1214 = vmax.f32 %v913, 0.0
  %v1215 = vmax.f32 %v1137, 0.0
  %v1216 = vmax.f32 %v1139, 0.0
  %v1217 = vmax.f32 %v915, 0.0
  %v1218 = vmax.f32 %v917, 0.0
  %v1219 = vmax.f32 %v1141, 0.0
  %v1220 = vmax.f32 %v1143, 0.0
  %v1221 = vmax.f32 %v921, 0.0
  %v1222 = vmax.f32 %v923, 0.0
  %v1223 = vmax.f32 %v1147, 0.0
  %v1224 = vmax.f32 %v1149, 0.0
  %v1225 = vmax.f32 %v925, 0.0
  %v1226 = vmax.f32 %v927, 0.0
  %v1227 = vmax.f32 %v1151, 0.0
  %v1228 = vmax.f32 %v1153, 0.0
  %v1229 = vmax.f32 %v931, 0.0
  %v1230 = vmax.f32 %v933, 0.0
  %v1231 = vmax.f32 %v1157, 0.0
  %v1232 = vmax.f32 %v1159, 0.0
  %v1233 = vmax.f32 %v935, 0.0
  %v1234 = vmax.f32 %v937, 0.0
  %v1235 = vmax.f32 %v1161, 0.0
  %v1236 = vmax.f32 %v1163, 0.0
  %v1237 = vmax.f32 %v941, 0.0
  %v1238 = vmax.f32 %v943, 0.0
  %v1239 = vmax.f32 %v1167, 0.0
  %v1240 = vmax.f32 %v1169, 0.0
  %v1241 = vmax.f32 %v945, 0.0
  %v1242 = vmax.f32 %v947, 0.0
  %v1243 = vmax.f32 %v1171, 0.0
  %v1244 = vmax.f32 %v1173, 0.0
  %v1245 = vmax.f32 %v951, 0.0
  %v1246 = vmax.f32 %v953, 0.0
  %v1247 = vmax.f32 %v1177, 0.0
  %v1248 = vmax.f32 %v1179, 0.0
  %v1249 = vmax.f32 %v955, 0.0
  %v1250 = vmax.f32 %v957, 0.0
  %v1251 = vmax.f32 %v1181, 0.0
  %v1252 = vmax.f32 %v1183, 0.0
  %v1253 = vmax.f32 %v961, 0.0
  %v1254 = vmax.f32 %v963, 0.0
  %v1255 = vmax.f32 %v1187, 0.0
  %v1256 = vmax.f32 %v1189, 0.0
  %v1257 = vmax.f32 %v965, 0.0
  %v1258 = vmax.f32 %v967, 0.0
  %v1259 = vmax.f32 %v1191, 0.0
  %v1260 = vmax.f32 %v1193, 0.0
  %v1261 = vmax.f32 %v971, 0.0
  %v1262 = vmax.f32 %v973, 0.0
  %v1263 = vmax.f32 %v1197, 0.0
  %v1264 = vmax.f32 %v1199, 0.0
  %v1265 = vmax.f32 %v975, 0.0
  %v1266 = vmax.f32 %v977, 0.0
  %v1267 = vmax.f32 %v1201, 0.0
  %v1268 = vmax.f32 %v1203, 0.0
  %v1269 = vmul.f32 %v1205, 0.5
  %v1270 = vmul.f32 %v1206, 0.5
  %v1271 = vmul.f32 %v1207, 0.5
  %v1272 = vmul.f32 %v1208, 0.5
  %v1273 = vmul.f32 %v1209, 0.5
  %v1274 = vmul.f32 %v1210, 0.5
  %v1275 = vmul.f32 %v1211, 0.5
  %v1276 = vmul.f32 %v1212, 0.5
  %v1277 = vmul.f32 %v1213, 0.5
  %v1278 = vmul.f32 %v1214, 0.5
  %v1279 = vmul.f32 %v1215, 0.5
  %v1280 = vmul.f32 %v1216, 0.5
  %v1281 = vmul.f32 %v1217, 0.5
  %v1282 = vmul.f32 %v1218, 0.5
  %v1283 = vmul.f32 %v1219, 0.5
  %v1284 = vmul.f32 %v1220, 0.5
  %v1285 = vmul.f32 %v1221, 0.5
  %v1286 = vmul.f32 %v1222, 0.5
  %v1287 = vmul.f32 %v1223, 0.5
  %v1288 = vmul.f32 %v1224, 0.5
  %v1289 = vmul.f32 %v1225, 0.5
  %v1290 = vmul.f32 %v1226, 0.5
  %v1291 = vmul.f32 %v1227, 0.5
  %v1292 = vmul.f32 %v1228, 0.5
  %v1293 = vmul.f32 %v1229, 0.5
  %v1294 = vmul.f32 %v1230, 0.5
  %v1295 = vmul.f32 %v1231, 0.5
  %v1296 = vmul.f32 %v1232, 0.5
  %v1297 = vmul.f32 %v1233, 0.5
  %v1298 = vmul.f32 %v1234, 0.5
  %v1299 = vmul.f32 %v1235, 0.5
  %v1300 = vmul.f32 %v1236, 0.5
  %v1301 = vmul.f32 %v1237, 0.5
  %v1302 = vmul.f32 %v1238, 0.5
  %v1303 = vmul.f32 %v1239, 0.5
  %v1304 = vmul.f32 %v1240, 0.5
  %v1305 = vmul.f32 %v1241, 0.5
  %v1306 = vmul.f32 %v1242, 0.5
  %v1307 = vmul.f32 %v1243, 0.5
  %v1308 = vmul.f32 %v1244, 0.5
  %v1309 = vmul.f32 %v1245, 0.5
  %v1310 = vmul.f32 %v1246, 0.5
  %v1311 = vmul.f32 %v1247, 0.5
  %v1312 = vmul.f32 %v1248, 0.5
  %v1313 = vmul.f32 %v1249, 0.5
  %v1314 = vmul.f32 %v1250, 0.5
  %v1315 = vmul.f32 %v1251, 0.5
  %v1316 = vmul.f32 %v1252, 0.5
  %v1317 = vtanh.pop %v1269
  %v1318 = vtanh.pop %v1270
  %v1319 = vtanh.pop %v1271
  %v1320 = vtanh.pop %v1272
  %v1321 = vtanh.pop %v1273
  %v1322 = vtanh.pop %v1274
  %v1323 = vtanh.pop %v1275
  %v1324 = vtanh.pop %v1276
  %v1325 = vtanh.pop %v1277
  %v1326 = vtanh.pop %v1278
  %v1327 = vtanh.pop %v1279
  %v1328 = vtanh.pop %v1280
  %v1329 = vtanh.pop %v1281
  %v1330 = vtanh.pop %v1282
  %v1331 = vtanh.pop %v1283
  %v1332 = vtanh.pop %v1284
  %v1333 = vtanh.pop %v1285
  %v1334 = vtanh.pop %v1286
  %v1335 = vtanh.pop %v1287
  %v1336 = vtanh.pop %v1288
  %v1337 = vtanh.pop %v1289
  %v1338 = vtanh.pop %v1290
  %v1339 = vtanh.pop %v1291
  %v1340 = vtanh.pop %v1292
  %v1341 = vtanh.pop %v1293
  %v1342 = vtanh.pop %v1294
  %v1343 = vtanh.pop %v1295
  %v1344 = vtanh.pop %v1296
  %v1345 = vtanh.pop %v1297
  %v1346 = vtanh.pop %v1298
  %v1347 = vtanh.pop %v1299
  %v1348 = vtanh.pop %v1300
  %v1349 = vtanh.pop %v1301
  %v1350 = vtanh.pop %v1302
  %v1351 = vtanh.pop %v1303
  %v1352 = vtanh.pop %v1304
  %v1353 = vtanh.pop %v1305
  %v1354 = vtanh.pop %v1306
  %v1355 = vtanh.pop %v1307
  %v1356 = vtanh.pop %v1308
  %v1357 = vtanh.pop %v1309
  %v1358 = vtanh.pop %v1310
  %v1359 = vtanh.pop %v1311
  %v1360 = vtanh.pop %v1312
  %v1361 = vtanh.pop %v1313
  %v1362 = vtanh.pop %v1314
  %v1363 = vtanh.pop %v1315
  %v1364 = vtanh.pop %v1316
  %v1365 = vmul.f32 %v1317, 0.5
  %v1366 = vmul.f32 %v1318, 0.5
  %v1367 = vmul.f32 %v1319, 0.5
  %v1368 = vmul.f32 %v1320, 0.5
  %v1369 = vmul.f32 %v1321, 0.5
  %v1370 = vmul.f32 %v1322, 0.5
  %v1371 = vmul.f32 %v1323, 0.5
  %v1372 = vmul.f32 %v1324, 0.5
  %v1373 = vmul.f32 %v1325, 0.5
  %v1374 = vmul.f32 %v1326, 0.5
  %v1375 = vmul.f32 %v1327, 0.5
  %v1376 = vmul.f32 %v1328, 0.5
  %v1377 = vmul.f32 %v1329, 0.5
  %v1378 = vmul.f32 %v1330, 0.5
  %v1379 = vmul.f32 %v1331, 0.5
  %v1380 = vmul.f32 %v1332, 0.5
  %v1381 = vmul.f32 %v1333, 0.5
  %v1382 = vmul.f32 %v1334, 0.5
  %v1383 = vmul.f32 %v1335, 0.5
  %v1384 = vmul.f32 %v1336, 0.5
  %v1385 = vmul.f32 %v1337, 0.5
  %v1386 = vmul.f32 %v1338, 0.5
  %v1387 = vmul.f32 %v1339, 0.5
  %v1388 = vmul.f32 %v1340, 0.5
  %v1389 = vmul.f32 %v1341, 0.5
  %v1390 = vmul.f32 %v1342, 0.5
  %v1391 = vmul.f32 %v1343, 0.5
  %v1392 = vmul.f32 %v1344, 0.5
  %v1393 = vmul.f32 %v1345, 0.5
  %v1394 = vmul.f32 %v1346, 0.5
  %v1395 = vmul.f32 %v1347, 0.5
  %v1396 = vmul.f32 %v1348, 0.5
  %v1397 = vmul.f32 %v1349, 0.5
  %v1398 = vmul.f32 %v1350, 0.5
  %v1399 = vmul.f32 %v1351, 0.5
  %v1400 = vmul.f32 %v1352, 0.5
  %v1401 = vmul.f32 %v1353, 0.5
  %v1402 = vmul.f32 %v1354, 0.5
  %v1403 = vmul.f32 %v1355, 0.5
  %v1404 = vmul.f32 %v1356, 0.5
  %v1405 = vmul.f32 %v1357, 0.5
  %v1406 = vmul.f32 %v1358, 0.5
  %v1407 = vmul.f32 %v1359, 0.5
  %v1408 = vmul.f32 %v1360, 0.5
  %v1409 = vmul.f32 %v1361, 0.5
  %v1410 = vmul.f32 %v1362, 0.5
  %v1411 = vmul.f32 %v1363, 0.5
  %v1412 = vmul.f32 %v1364, 0.5
  %v1413 = vadd.f32 %v1365, 0.5
  %v1414 = vadd.f32 %v1366, 0.5
  %v1415 = vadd.f32 %v1367, 0.5
  %v1416 = vadd.f32 %v1368, 0.5
  %v1417 = vadd.f32 %v1369, 0.5
  %v1418 = vadd.f32 %v1370, 0.5
  %v1419 = vadd.f32 %v1371, 0.5
  %v1420 = vadd.f32 %v1372, 0.5
  %v1421 = vadd.f32 %v1373, 0.5
  %v1422 = vadd.f32 %v1374, 0.5
  %v1423 = vadd.f32 %v1375, 0.5
  %v1424 = vadd.f32 %v1376, 0.5
  %v1425 = vadd.f32 %v1377, 0.5
  %v1426 = vadd.f32 %v1378, 0.5
  %v1427 = vadd.f32 %v1379, 0.5
  %v1428 = vadd.f32 %v1380, 0.5
  %v1429 = vadd.f32 %v1381, 0.5
  %v1430 = vadd.f32 %v1382, 0.5
  %v1431 = vadd.f32 %v1383, 0.5
  %v1432 = vadd.f32 %v1384, 0.5
  %v1433 = vadd.f32 %v1385, 0.5
  %v1434 = vadd.f32 %v1386, 0.5
  %v1435 = vadd.f32 %v1387, 0.5
  %v1436 = vadd.f32 %v1388, 0.5
  %v1437 = vadd.f32 %v1389, 0.5
  %v1438 = vadd.f32 %v1390, 0.5
  %v1439 = vadd.f32 %v1391, 0.5
  %v1440 = vadd.f32 %v1392, 0.5
  %v1441 = vadd.f32 %v1393, 0.5
  %v1442 = vadd.f32 %v1394, 0.5
  %v1443 = vadd.f32 %v1395, 0.5
  %v1444 = vadd.f32 %v1396, 0.5
  %v1445 = vadd.f32 %v1397, 0.5
  %v1446 = vadd.f32 %v1398, 0.5
  %v1447 = vadd.f32 %v1399, 0.5
  %v1448 = vadd.f32 %v1400, 0.5
  %v1449 = vadd.f32 %v1401, 0.5
  %v1450 = vadd.f32 %v1402, 0.5
  %v1451 = vadd.f32 %v1403, 0.5
  %v1452 = vadd.f32 %v1404, 0.5
  %v1453 = vadd.f32 %v1405, 0.5
  %v1454 = vadd.f32 %v1406, 0.5
  %v1455 = vadd.f32 %v1407, 0.5
  %v1456 = vadd.f32 %v1408, 0.5
  %v1457 = vadd.f32 %v1409, 0.5
  %v1458 = vadd.f32 %v1410, 0.5
  %v1459 = vadd.f32 %v1411, 0.5
  %v1460 = vadd.f32 %v1412, 0.5
  %v1461 = vtanh.pop %v1253
  %v1462 = vtanh.pop %v1254
  %v1463 = vtanh.pop %v1255
  %v1464 = vtanh.pop %v1256
  %v1465 = vtanh.pop %v1257
  %v1466 = vtanh.pop %v1258
  %v1467 = vtanh.pop %v1259
  %v1468 = vtanh.pop %v1260
  %v1469 = vtanh.pop %v1261
  %v1470 = vtanh.pop %v1262
  %v1471 = vtanh.pop %v1263
  %v1472 = vtanh.pop %v1264
  %v1473 = vtanh.pop %v1265
  %v1474 = vtanh.pop %v1266
  %v1475 = vtanh.pop %v1267
  %v1476 = vtanh.pop %v1268
  %v1477 = vld [vmem:[%s2] sm:$0xff]
  %v1478 = vld [vmem:[%s2 + $0x8] sm:$0xff]
  %v1479 = vld [vmem:[%s2 + $0x10] sm:$0xff]
  %v1480 = vld [vmem:[%s2 + $0x18] sm:$0xff]
  %v1481 = vld [vmem:[%s2 + $0x20] sm:$0xff]
  %v1482 = vld [vmem:[%s2 + $0x28] sm:$0xff]
  %v1483 = vld [vmem:[%s2 + $0x30] sm:$0xff]
  %v1484 = vld [vmem:[%s2 + $0x38] sm:$0xff]
  %v1485 = vld [vmem:[%s2 + $0x40] sm:$0xff]
  %v1486 = vld [vmem:[%s2 + $0x48] sm:$0xff]
  %v1487 = vld [vmem:[%s2 + $0x50] sm:$0xff]
  %v1488 = vld [vmem:[%s2 + $0x58] sm:$0xff]
  %v1489 = vld [vmem:[%s2 + $0x60] sm:$0xff]
  %v1490 = vld [vmem:[%s2 + $0x68] sm:$0xff]
  %v1491 = vld [vmem:[%s2 + $0x70] sm:$0xff]
  %v1492 = vld [vmem:[%s2 + $0x78] sm:$0xff]
  %v1493 = vmul.f32 %v1429, %v1477
  %v1494 = vmul.f32 %v1430, %v1478
  %v1495 = vmul.f32 %v1431, %v1479
  %v1496 = vmul.f32 %v1432, %v1480
  %v1497 = vmul.f32 %v1433, %v1481
  %v1498 = vmul.f32 %v1434, %v1482
  %v1499 = vmul.f32 %v1435, %v1483
  %v1500 = vmul.f32 %v1436, %v1484
  %v1501 = vmul.f32 %v1437, %v1485
  %v1502 = vmul.f32 %v1438, %v1486
  %v1503 = vmul.f32 %v1439, %v1487
  %v1504 = vmul.f32 %v1440, %v1488
  %v1505 = vmul.f32 %v1441, %v1489
  %v1506 = vmul.f32 %v1442, %v1490
  %v1507 = vmul.f32 %v1443, %v1491
  %v1508 = vmul.f32 %v1444, %v1492
  %v1509 = vmul.f32 %v1413, %v1461
  %v1510 = vmul.f32 %v1414, %v1462
  %v1511 = vmul.f32 %v1415, %v1463
  %v1512 = vmul.f32 %v1416, %v1464
  %v1513 = vmul.f32 %v1417, %v1465
  %v1514 = vmul.f32 %v1418, %v1466
  %v1515 = vmul.f32 %v1419, %v1467
  %v1516 = vmul.f32 %v1420, %v1468
  %v1517 = vmul.f32 %v1421, %v1469
  %v1518 = vmul.f32 %v1422, %v1470
  %v1519 = vmul.f32 %v1423, %v1471
  %v1520 = vmul.f32 %v1424, %v1472
  %v1521 = vmul.f32 %v1425, %v1473
  %v1522 = vmul.f32 %v1426, %v1474
  %v1523 = vmul.f32 %v1427, %v1475
  %v1524 = vmul.f32 %v1428, %v1476
  %v1525 = vadd.f32 %v1493, %v1509
  %v1526 = vadd.f32 %v1494, %v1510
  %v1527 = vadd.f32 %v1495, %v1511
  %v1528 = vadd.f32 %v1496, %v1512
  %v1529 = vadd.f32 %v1497, %v1513
  %v1530 = vadd.f32 %v1498, %v1514
  %v1531 = vadd.f32 %v1499, %v1515
  %v1532 = vadd.f32 %v1500, %v1516
  %v1533 = vadd.f32 %v1501, %v1517
  %v1534 = vadd.f32 %v1502, %v1518
  %v1535 = vadd.f32 %v1503, %v1519
  %v1536 = vadd.f32 %v1504, %v1520
  %v1537 = vadd.f32 %v1505, %v1521
  %v1538 = vadd.f32 %v1506, %v1522
  %v1539 = vadd.f32 %v1507, %v1523
  %v1540 = vadd.f32 %v1508, %v1524
  %v1541 = vtanh.pop %v1525
  %v1542 = vtanh.pop %v1526
  %v1543 = vtanh.pop %v1527
  %v1544 = vtanh.pop %v1528
  %v1545 = vtanh.pop %v1529
  %v1546 = vtanh.pop %v1530
  %v1547 = vtanh.pop %v1531
  %v1548 = vtanh.pop %v1532
  %v1549 = vtanh.pop %v1533
  %v1550 = vtanh.pop %v1534
  %v1551 = vtanh.pop %v1535
  %v1552 = vtanh.pop %v1536
  %v1553 = vtanh.pop %v1537
  %v1554 = vtanh.pop %v1538
  %v1555 = vtanh.pop %v1539
  %v1556 = vtanh.pop %v1540
  %v1557 = vmul.f32 %v1445, %v1541
  %v1558 = vmul.f32 %v1446, %v1542
  %v1559 = vmul.f32 %v1447, %v1543
  %v1560 = vmul.f32 %v1448, %v1544
  %v1561 = vmul.f32 %v1449, %v1545
  %v1562 = vmul.f32 %v1450, %v1546
  %v1563 = vmul.f32 %v1451, %v1547
  %v1564 = vmul.f32 %v1452, %v1548
  %v1565 = vmul.f32 %v1453, %v1549
  %v1566 = vmul.f32 %v1454, %v1550
  %v1567 = vmul.f32 %v1455, %v1551
  %v1568 = vmul.f32 %v1456, %v1552
  %v1569 = vmul.f32 %v1457, %v1553
  %v1570 = vmul.f32 %v1458, %v1554
  %v1571 = vmul.f32 %v1459, %v1555
  %v1572 = vmul.f32 %v1460, %v1556
  %v1573 = vpack.c.bf16 %v1561, %v1557
  %v1574 = vpack.c.bf16 %v1562, %v1558
  %v1575 = vpack.c.bf16 %v1563, %v1559
  %v1576 = vpack.c.bf16 %v1564, %v1560
  %v1577 = vpack.c.bf16 %v1569, %v1565
  %v1578 = vpack.c.bf16 %v1570, %v1566
  %v1579 = vpack.c.bf16 %v1571, %v1567
  %v1580 = vpack.c.bf16 %v1572, %v1568
  %v1589 = vunpack.c.l.b16 %v1573
  %v1590 = vunpack.c.l.b16 %v1574
  %v1591 = vunpack.c.l.b16 %v1575
  %v1592 = vunpack.c.l.b16 %v1576
  %v1593 = vunpack.c.h.b16 %v1573
  %v1594 = vunpack.c.h.b16 %v1574
  %v1595 = vunpack.c.h.b16 %v1575
  %v1596 = vunpack.c.h.b16 %v1576
  %v1597 = vunpack.c.l.b16 %v1577
  %v1598 = vunpack.c.l.b16 %v1578
  %v1599 = vunpack.c.l.b16 %v1579
  %v1600 = vunpack.c.l.b16 %v1580
  %v1601 = vunpack.c.h.b16 %v1577
  %v1602 = vunpack.c.h.b16 %v1578
  %v1603 = vunpack.c.h.b16 %v1579
  %v1604 = vunpack.c.h.b16 %v1580
  %v1605 = vpack.c.b16 %v1590, %v1589
  %v1606 = vpack.c.b16 %v1592, %v1591
  %v1607 = vpack.c.b16 %v1594, %v1593
  %v1608 = vpack.c.b16 %v1596, %v1595
  %v1609 = vpack.c.b16 %v1598, %v1597
  %v1610 = vpack.c.b16 %v1600, %v1599
  %v1611 = vpack.c.b16 %v1602, %v1601
  %v1612 = vpack.c.b16 %v1604, %v1603
  %1621 = vst [vmem:[%s3] sm:$0xff] %v1605
  %1622 = vst [vmem:[%s3 + $0x8] sm:$0xff] %v1606
  %1623 = vst [vmem:[%s3 + $0x10] sm:$0xff] %v1607
  %1624 = vst [vmem:[%s3 + $0x18] sm:$0xff] %v1608
  %1625 = vst [vmem:[%s3 + $0x20] sm:$0xff] %v1609
  %1626 = vst [vmem:[%s3 + $0x28] sm:$0xff] %v1610
  %1627 = vst [vmem:[%s3 + $0x30] sm:$0xff] %v1611
  %1628 = vst [vmem:[%s3 + $0x38] sm:$0xff] %v1612
  %1629 = vst [vmem:[%s4] sm:$0xff] %v1525
  %1630 = vst [vmem:[%s4 + $0x8] sm:$0xff] %v1526
  %1631 = vst [vmem:[%s4 + $0x10] sm:$0xff] %v1527
  %1632 = vst [vmem:[%s4 + $0x18] sm:$0xff] %v1528
  %1633 = vst [vmem:[%s4 + $0x20] sm:$0xff] %v1529
  %1634 = vst [vmem:[%s4 + $0x28] sm:$0xff] %v1530
  %1635 = vst [vmem:[%s4 + $0x30] sm:$0xff] %v1531
  %1636 = vst [vmem:[%s4 + $0x38] sm:$0xff] %v1532
  %1637 = vst [vmem:[%s4 + $0x40] sm:$0xff] %v1533
  %1638 = vst [vmem:[%s4 + $0x48] sm:$0xff] %v1534
  %1639 = vst [vmem:[%s4 + $0x50] sm:$0xff] %v1535
  %1640 = vst [vmem:[%s4 + $0x58] sm:$0xff] %v1536
  %1641 = vst [vmem:[%s4 + $0x60] sm:$0xff] %v1537
  %1642 = vst [vmem:[%s4 + $0x68] sm:$0xff] %v1538
  %1643 = vst [vmem:[%s4 + $0x70] sm:$0xff] %v1539
  %1644 = vst [vmem:[%s4 + $0x78] sm:$0xff] %v1540
  // Predicated region
  $region14: #{convlstm_cell_forward.1} parent=0 // pred_check
    _
  $region15: #{convlstm_cell_forward.1} parent=0 // pred_check_branch
    %1646 = sbr.rel (0) target = $region17
  $region16: #{convlstm_cell_forward.1} parent=0 // pred_region
    _
  $region17: #{convlstm_cell_forward.1} parent=0 // pred_fallthru
    _
  // Predicated region
  $region18: #{convlstm_cell_forward.1} parent=0 // pred_check
    _
  $region19: #{convlstm_cell_forward.1} parent=0 // pred_check_branch
    %1648 = sbr.rel (0) target = $region21
  $region20: #{convlstm_cell_forward.1} parent=0 // pred_region
    _
  $region21: #{convlstm_cell_forward.1} parent=0 // pred_fallthru
    _
  // Predicated region
  $region22: #{convlstm_cell_forward.1} parent=0 // pred_check
    _
  $region23: #{convlstm_cell_forward.1} parent=0 // pred_check_branch
    %1650 = sbr.rel (0) target = $region25
  $region24: #{convlstm_cell_forward.1} parent=0 // pred_region
    _
  $region25: #{convlstm_cell_forward.1} parent=0 // pred_fallthru
    _
  // Predicated region
  $region26: #{convlstm_cell_forward.1} parent=0 // pred_check
    _
  $region27: #{convlstm_cell_forward.1} parent=0 // pred_check_branch
    %1652 = sbr.rel (0) target = $region29
  $region28: #{convlstm_cell_forward.1} parent=0 // pred_region
    _
  $region29: #{convlstm_cell_forward.1} parent=0 // pred_fallthru
    _

</llo_original>
